<compile_context>
chip_gen: v6e
topology: v6e:2x2x1
jax: 0.10.0
libtpu: 0.0.40
codegen_flags: <defaults>
</compile_context>

<pallas_src>
import jax
import jax.numpy as jnp
import numpy as np
from jax import lax
from jax.experimental import pallas as pl
from jax.experimental.pallas import tpu as pltpu
from jax.scipy.linalg import block_diag


def persona_gru_kernel(xp_ref, m_ref, hx_ref, wih_ref, bih_ref, whh_ref, bhn_ref,
                       out_ref):
    """Single-invocation fused PersonaGRU kernel.

    xp_ref : (T*2B, Din) bf16  packed inputs; step t rows [0:B]=x[t] (fr pass),
                               rows [B:2B]=x[T-1-t] (bk pass)
    m_ref  : (T, 2B, 1) i32    rows [0:B] = fr mask, [B:2B] = bk mask (step t)
    hx_ref : (2B, 2H)  f32     reset hidden, columns [0:H]=dir0, [H:2H]=dir1
    wih_ref: (Din, 6H) bf16    fused input weights, cols [r0|r1|z0|z1|n0|n1]
    bih_ref: (1, 6H)   f32     bih (+ folded bhh for the r/z slices)
    whh_ref: (2H, 6H)  bf16    block-diagonal fused hidden weights
    bhn_ref: (1, 2H)   f32     n-gate hidden bias [bhn0 | bhn1]
    out_ref: (T, B, 4H) f32    [:, :, 0:2H] = fr features, [:, :, 2H:4H] = bk
    """
    T, B, _ = out_ref.shape
    B2 = 2 * B
    G = whh_ref.shape[0]            # fused gate width = 2H (dir0 | dir1)

    # ---- Prologue: ONE input-projection matmul for every timestep, both
    # passes, both directions and all 3 gates (bf16 operands, f32 accum).
    # bih_ref already contains the folded r/z hidden biases.
    gi = jnp.dot(xp_ref[...], wih_ref[...],
                 preferred_element_type=jnp.float32) + bih_ref[...]      # (T*2B, 6H)

    hx = hx_ref[...]                # (2B, 2H) f32
    whh = whh_ref[...]              # (2H, 6H) bf16, block-diagonal
    bhn = bhn_ref[...]              # (1, 2H)  f32

    # ---- Recurrence: fully unrolled (T is small & static); exactly one
    # fused (2B, 2H) @ (2H, 6H) matmul per step on the serial critical path.
    h = hx                          # rows [0:B] = fr carry, [B:2B] = bk carry
    hist = []
    for t in range(T):
        keep = m_ref[t] == 1                                             # (2B, 1)
        hg = jnp.where(keep, h, hx)                                      # (2B, 2H) f32
        gh = jnp.dot(hg.astype(jnp.bfloat16), whh,
                     preferred_element_type=jnp.float32)                 # (2B, 6H) f32
        g = gi[t * B2:(t + 1) * B2, :]                                   # (2B, 6H)
        r = jax.nn.sigmoid(g[:, 0:G] + gh[:, 0:G])
        z = jax.nn.sigmoid(g[:, G:2 * G] + gh[:, G:2 * G])
        n = jnp.tanh(g[:, 2 * G:] + r * (gh[:, 2 * G:] + bhn))
        h = (1.0 - z) * n + z * hg                                       # (2B, 2H)
        hist.append(h)

    # ---- Epilogue: lane-dense (B, 4H)=(2,128) stores.  fr(t) pairs with the
    # bk result computed at iteration T-1-t, which un-reverses the bk pass
    # without any flip.
    for t in range(T):
        out_ref[t] = jnp.concatenate([hist[t][0:B, :], hist[T - 1 - t][B:, :]],
                                     axis=-1)


def pack_params(params, batch):
    """Repack PyTorch-layout GRU params into the fused kernel layout (once)."""
    wih, whh, bih, bhh, hx = (params[k] for k in ("wih", "whh", "bih", "bhh", "hx"))
    Din = wih.shape[1]
    H = whh.shape[1]
    H2, H6 = 2 * H, 6 * H

    # Fused column layout [r0|r1|z0|z1|n0|n1]: gate-major, direction-minor, so
    # each gate slice's [0:H]/[H:2H] halves align with the (dir0|dir1) hidden.
    wih_g = wih.reshape(2, Din, 3, H)                              # (dir, Din, gate, H)
    wih_cat = jnp.transpose(wih_g, (1, 2, 0, 3)).reshape(Din, H6).astype(jnp.bfloat16)

    whh_g = whh.reshape(2, H, 3, H)                                # (dir, H, gate, H)
    gate_blocks = [block_diag(whh_g[0, :, g, :], whh_g[1, :, g, :]) for g in range(3)]
    whh_bd = jnp.concatenate(gate_blocks, axis=1).astype(jnp.bfloat16)   # (2H, 6H)

    bih_g = bih.reshape(2, 3, H)
    bhh_g = bhh.reshape(2, 3, H)
    # Fold bhh into the r/z biases; the n-gate bhh must stay inside r*(...).
    b_fold = jnp.concatenate([bih_g[:, 0:2, :] + bhh_g[:, 0:2, :],
                              bih_g[:, 2:3, :]], axis=1)           # (dir, gate, H)
    bih_full = jnp.transpose(b_fold, (1, 0, 2)).reshape(1, H6).astype(jnp.float32)
    bhn = bhh_g[:, 2, :].reshape(1, H2).astype(jnp.float32)        # (1, 2H)

    hx_row = jnp.concatenate([hx[0, 0], hx[1, 0]], axis=-1)        # (2H,)
    hx_b = jnp.broadcast_to(hx_row[None, :], (2 * batch, H2)).astype(jnp.float32)

    return dict(wih=wih_cat, whh=whh_bd, bih=bih_full, bhn=bhn, hx=hx_b)


def persona_gru_forward(seqs, mask_fr, mask_bk, packed):
    """seqs: (B, T, Din) f32; masks: (B, T) 0/1.  Returns (B, T, 4H) f32."""
    B, T, Din = seqs.shape
    H2 = packed["hx"].shape[1]
    H = H2 // 2

    x = jnp.transpose(seqs, (1, 0, 2)).astype(jnp.float32)         # (T, B, Din)
    # Pack each step's fr rows (x[t]) and bk rows (x[T-1-t]) together so the
    # kernel never concatenates or double-reads inside the recurrence.
    xp = jnp.concatenate([x, x[::-1]], axis=1)                     # (T, 2B, Din)
    xp = xp.reshape(T * 2 * B, Din).astype(jnp.bfloat16)

    # Masks packed per processing step t: rows [0:B] = fr, [B:2B] = bk.
    m = jnp.concatenate([mask_fr.T, mask_bk.T], axis=-1).astype(jnp.int32)
    m = m[..., None]                                               # (T, 2B, 1)

    vmem = pl.BlockSpec(memory_space=pltpu.MemorySpace.VMEM)
    out = pl.pallas_call(
        persona_gru_kernel,
        out_shape=jax.ShapeDtypeStruct((T, B, 4 * H), jnp.float32),
        in_specs=[vmem] * 7,
        out_specs=vmem,
    )(xp, m, packed["hx"], packed["wih"], packed["bih"], packed["whh"], packed["bhn"])

    return jnp.transpose(out, (1, 0, 2))                           # (B, T, 4H)


def init_params(key, utterance_hidden):
    """Deterministic synthetic GRU parameters (PyTorch nn.GRU layout, re-split).

    Gate order follows PyTorch (r, z, n); weights are transposed for
    right-multiplication with the 3 gates along the last dim.
    """
    H = utterance_hidden          # persona_hidden == utterance_hidden (required)
    Din = 2 * H                   # persona_input
    ks = jax.random.split(key, 9)
    scale = 1.0 / np.sqrt(H)

    def u(k, shape):
        return jax.random.uniform(k, shape, jnp.float32, minval=-scale, maxval=scale)

    wih = jnp.stack([u(ks[0], (3 * H, Din)).T, u(ks[1], (3 * H, Din)).T])  # (2, Din, 3H)
    whh = jnp.stack([u(ks[2], (3 * H, H)).T, u(ks[3], (3 * H, H)).T])      # (2, H, 3H)
    bih = jnp.stack([u(ks[4], (3 * H,)), u(ks[5], (3 * H,))])[:, None, :]  # (2, 1, 3H)
    bhh = jnp.stack([u(ks[6], (3 * H,)), u(ks[7], (3 * H,))])[:, None, :]  # (2, 1, 3H)
    hx = jax.random.normal(ks[8], (2, 1, H), jnp.float32)                  # self.hx
    return dict(wih=wih, whh=whh, bih=bih, bhh=bhh, hx=hx)


def persona_gru_reference(seqs, mask_fr, mask_bk, params, matmul_dtype=jnp.float32):
    """Pure-JAX reference with identical semantics (matmul operand dtype knob)."""
    wih, whh, bih, bhh, hx = (params[k] for k in ("wih", "whh", "bih", "bhh", "hx"))
    B, T, Din = seqs.shape
    H = whh.shape[1]
    hx0 = jnp.broadcast_to(hx, (2, B, H)).astype(jnp.float32)

    def mm(a, b):
        return jnp.dot(a.astype(matmul_dtype), b.astype(matmul_dtype),
                       preferred_element_type=jnp.float32)

    def cell(x, h):
        hs = []
        for k in range(2):
            gi = mm(x, wih[k]) + bih[k]
            gh = mm(h[k], whh[k]) + bhh[k]
            r = jax.nn.sigmoid(gi[:, :H] + gh[:, :H])
            z = jax.nn.sigmoid(gi[:, H:2 * H] + gh[:, H:2 * H])
            n = jnp.tanh(gi[:, 2 * H:] + r * gh[:, 2 * H:])
            hs.append((1.0 - z) * n + z * h[k])
        return jnp.stack(hs), jnp.concatenate(hs, -1)

    def run(xs, ms):  # xs: (T, B, Din), ms: (T, B)
        def step(h, tm):
            x, m = tm
            hg = jnp.where(m[None, :, None] == 1, h, hx0)
            hn, o = cell(x, hg)
            return hn, o
        _, outs = lax.scan(step, hx0, (xs, ms))
        return outs

    x_fr = jnp.transpose(seqs, (1, 0, 2)).astype(jnp.float32)
    out_fr = run(x_fr, mask_fr.T)
    out_bk = jnp.flip(run(jnp.flip(x_fr, 0), mask_bk.T), 0)
    return jnp.transpose(jnp.concatenate([out_fr, out_bk], -1), (1, 0, 2))


if __name__ == "__main__":
    B, T, H = 2, 10, 32          # batch, seq_len (module hard-codes 10), utterance_hidden
    Din = 2 * H                  # persona_input

    key = jax.random.PRNGKey(0)
    kp, kx, kf, kb = jax.random.split(key, 4)
    params = init_params(kp, H)
    seqs = jax.random.normal(kx, (B, T, Din), jnp.float32)       # batch_sequences
    mask_fr = (jax.random.uniform(kf, (B, T)) > 0.3).astype(jnp.int32)
    mask_bk = (jax.random.uniform(kb, (B, T)) > 0.3).astype(jnp.int32)

    packed = pack_params(params, B)                              # one-time repack
    out = jax.jit(persona_gru_forward)(seqs, mask_fr, mask_bk, packed)
    out = jax.block_until_ready(out)
    assert out.shape == (B, T, 4 * H)

    # Structural check: reference using the same bf16 matmul-operand precision.
    ref_bf16 = persona_gru_reference(seqs, mask_fr, mask_bk, params,
                                     matmul_dtype=jnp.bfloat16)
    np.testing.assert_allclose(np.asarray(out), np.asarray(ref_bf16),
                               atol=2e-3, rtol=2e-3)
    # Coarse bound against the exact f32 reference (bf16 operand quantization).
    ref_f32 = persona_gru_reference(seqs, mask_fr, mask_bk, params)
    np.testing.assert_allclose(np.asarray(out), np.asarray(ref_f32),
                               atol=2e-1, rtol=2e-1)
    print("KERNEL_OK")
</pallas_src>

<mosaic_0001>
module attributes {stable_mosaic.version = 11 : i64} {
  func.func @persona_gru_kernel(%arg0: memref<40x64xbf16, #tpu.memory_space<vmem>>, %arg1: memref<10x4x1xi32, #tpu.memory_space<vmem>>, %arg2: memref<4x64xf32, #tpu.memory_space<vmem>>, %arg3: memref<64x192xbf16, #tpu.memory_space<vmem>>, %arg4: memref<1x192xf32, #tpu.memory_space<vmem>>, %arg5: memref<64x192xbf16, #tpu.memory_space<vmem>>, %arg6: memref<1x64xf32, #tpu.memory_space<vmem>>, %arg7: memref<10x2x128xf32, #tpu.memory_space<vmem>>) attributes {dimension_semantics = [], scalar_prefetch = 0 : i64, scratch_operands = 0 : i64, tpu.core_type = #tpu.core_type<tc>} {
    %c0 = arith.constant 0 : index
    %c0_0 = arith.constant 0 : index
    %0 = vector.load %arg0[%c0, %c0_0] : memref<40x64xbf16, #tpu.memory_space<vmem>>, vector<40x64xbf16>
    %c0_1 = arith.constant 0 : index
    %c0_2 = arith.constant 0 : index
    %1 = vector.load %arg3[%c0_1, %c0_2] : memref<64x192xbf16, #tpu.memory_space<vmem>>, vector<64x192xbf16>
    %cst = arith.constant dense<0.000000e+00> : vector<40x192xf32>
    %2 = tpu.matmul %0, %1, %cst {dimension_numbers = #tpu.dot_dimension_numbers<[1], [0], [0], [1], [0, 0, 1, 1], [], []>} : vector<40x64xbf16>, vector<64x192xbf16>, vector<40x192xf32> -> vector<40x192xf32>
    %c0_3 = arith.constant 0 : index
    %c0_4 = arith.constant 0 : index
    %3 = vector.load %arg4[%c0_3, %c0_4] : memref<1x192xf32, #tpu.memory_space<vmem>>, vector<1x192xf32>
    %4 = vector.broadcast %3 : vector<1x192xf32> to vector<40x192xf32>
    %5 = arith.addf %2, %4 : vector<40x192xf32>
    %c0_5 = arith.constant 0 : index
    %c0_6 = arith.constant 0 : index
    %6 = vector.load %arg2[%c0_5, %c0_6] : memref<4x64xf32, #tpu.memory_space<vmem>>, vector<4x64xf32>
    %c0_7 = arith.constant 0 : index
    %c0_8 = arith.constant 0 : index
    %7 = vector.load %arg5[%c0_7, %c0_8] : memref<64x192xbf16, #tpu.memory_space<vmem>>, vector<64x192xbf16>
    %c0_9 = arith.constant 0 : index
    %c0_10 = arith.constant 0 : index
    %8 = vector.load %arg6[%c0_9, %c0_10] : memref<1x64xf32, #tpu.memory_space<vmem>>, vector<1x64xf32>
    %c0_11 = arith.constant 0 : index
    %c0_12 = arith.constant 0 : index
    %c0_13 = arith.constant 0 : index
    %9 = vector.load %arg1[%c0_11, %c0_12, %c0_13] : memref<10x4x1xi32, #tpu.memory_space<vmem>>, vector<1x4x1xi32>
    %10 = vector.shape_cast %9 : vector<1x4x1xi32> to vector<4x1xi32>
    %c1_i32 = arith.constant 1 : i32
    %11 = vector.broadcast %c1_i32 : i32 to vector<4x1xi32>
    %12 = arith.cmpi eq, %10, %11 : vector<4x1xi32>
    %13 = vector.shape_cast %12 : vector<4x1xi1> to vector<4x1xi1>
    %14 = vector.broadcast %13 : vector<4x1xi1> to vector<4x64xi1>
    %15 = arith.select %14, %6, %6 : vector<4x64xi1>, vector<4x64xf32>
    %16 = arith.truncf %15 : vector<4x64xf32> to vector<4x64xbf16>
    %cst_14 = arith.constant dense<0.000000e+00> : vector<4x192xf32>
    %17 = tpu.matmul %16, %7, %cst_14 {dimension_numbers = #tpu.dot_dimension_numbers<[1], [0], [0], [1], [0, 0, 1, 1], [], []>} : vector<4x64xbf16>, vector<64x192xbf16>, vector<4x192xf32> -> vector<4x192xf32>
    %18 = vector.extract_strided_slice %5 {offsets = [0, 0], sizes = [4, 192], strides = [1, 1]} : vector<40x192xf32> to vector<4x192xf32>
    %19 = vector.extract_strided_slice %18 {offsets = [0, 0], sizes = [4, 64], strides = [1, 1]} : vector<4x192xf32> to vector<4x64xf32>
    %20 = vector.extract_strided_slice %17 {offsets = [0, 0], sizes = [4, 64], strides = [1, 1]} : vector<4x192xf32> to vector<4x64xf32>
    %21 = arith.addf %19, %20 : vector<4x64xf32>
    %22 = arith.negf %21 : vector<4x64xf32>
    %23 = math.exp %22 : vector<4x64xf32>
    %cst_15 = arith.constant 1.000000e+00 : f32
    %24 = vector.broadcast %cst_15 : f32 to vector<4x64xf32>
    %25 = arith.addf %24, %23 : vector<4x64xf32>
    %26 = arith.divf %24, %25 : vector<4x64xf32>
    %27 = vector.extract_strided_slice %18 {offsets = [0, 64], sizes = [4, 64], strides = [1, 1]} : vector<4x192xf32> to vector<4x64xf32>
    %28 = vector.extract_strided_slice %17 {offsets = [0, 64], sizes = [4, 64], strides = [1, 1]} : vector<4x192xf32> to vector<4x64xf32>
    %29 = arith.addf %27, %28 : vector<4x64xf32>
    %30 = arith.negf %29 : vector<4x64xf32>
    %31 = math.exp %30 : vector<4x64xf32>
    %cst_16 = arith.constant 1.000000e+00 : f32
    %32 = vector.broadcast %cst_16 : f32 to vector<4x64xf32>
    %33 = arith.addf %32, %31 : vector<4x64xf32>
    %34 = arith.divf %32, %33 : vector<4x64xf32>
    %35 = vector.extract_strided_slice %18 {offsets = [0, 128], sizes = [4, 64], strides = [1, 1]} : vector<4x192xf32> to vector<4x64xf32>
    %36 = vector.extract_strided_slice %17 {offsets = [0, 128], sizes = [4, 64], strides = [1, 1]} : vector<4x192xf32> to vector<4x64xf32>
    %37 = vector.broadcast %8 : vector<1x64xf32> to vector<4x64xf32>
    %38 = arith.addf %36, %37 : vector<4x64xf32>
    %39 = arith.mulf %26, %38 : vector<4x64xf32>
    %40 = arith.addf %35, %39 : vector<4x64xf32>
    %41 = math.tanh %40 : vector<4x64xf32>
    %cst_17 = arith.constant 1.000000e+00 : f32
    %42 = vector.broadcast %cst_17 : f32 to vector<4x64xf32>
    %43 = arith.subf %42, %34 : vector<4x64xf32>
    %44 = arith.mulf %43, %41 : vector<4x64xf32>
    %45 = arith.mulf %34, %15 : vector<4x64xf32>
    %46 = arith.addf %44, %45 : vector<4x64xf32>
    %c1 = arith.constant 1 : index
    %c0_18 = arith.constant 0 : index
    %c0_19 = arith.constant 0 : index
    %47 = vector.load %arg1[%c1, %c0_18, %c0_19] : memref<10x4x1xi32, #tpu.memory_space<vmem>>, vector<1x4x1xi32>
    %48 = vector.shape_cast %47 : vector<1x4x1xi32> to vector<4x1xi32>
    %c1_i32_20 = arith.constant 1 : i32
    %49 = vector.broadcast %c1_i32_20 : i32 to vector<4x1xi32>
    %50 = arith.cmpi eq, %48, %49 : vector<4x1xi32>
    %51 = vector.shape_cast %50 : vector<4x1xi1> to vector<4x1xi1>
    %52 = vector.broadcast %51 : vector<4x1xi1> to vector<4x64xi1>
    %53 = arith.select %52, %46, %6 : vector<4x64xi1>, vector<4x64xf32>
    %54 = arith.truncf %53 : vector<4x64xf32> to vector<4x64xbf16>
    %cst_21 = arith.constant dense<0.000000e+00> : vector<4x192xf32>
    %55 = tpu.matmul %54, %7, %cst_21 {dimension_numbers = #tpu.dot_dimension_numbers<[1], [0], [0], [1], [0, 0, 1, 1], [], []>} : vector<4x64xbf16>, vector<64x192xbf16>, vector<4x192xf32> -> vector<4x192xf32>
    %56 = vector.extract_strided_slice %5 {offsets = [4, 0], sizes = [4, 192], strides = [1, 1]} : vector<40x192xf32> to vector<4x192xf32>
    %57 = vector.extract_strided_slice %56 {offsets = [0, 0], sizes = [4, 64], strides = [1, 1]} : vector<4x192xf32> to vector<4x64xf32>
    %58 = vector.extract_strided_slice %55 {offsets = [0, 0], sizes = [4, 64], strides = [1, 1]} : vector<4x192xf32> to vector<4x64xf32>
    %59 = arith.addf %57, %58 : vector<4x64xf32>
    %60 = arith.negf %59 : vector<4x64xf32>
    %61 = math.exp %60 : vector<4x64xf32>
    %cst_22 = arith.constant 1.000000e+00 : f32
    %62 = vector.broadcast %cst_22 : f32 to vector<4x64xf32>
    %63 = arith.addf %62, %61 : vector<4x64xf32>
    %64 = arith.divf %62, %63 : vector<4x64xf32>
    %65 = vector.extract_strided_slice %56 {offsets = [0, 64], sizes = [4, 64], strides = [1, 1]} : vector<4x192xf32> to vector<4x64xf32>
    %66 = vector.extract_strided_slice %55 {offsets = [0, 64], sizes = [4, 64], strides = [1, 1]} : vector<4x192xf32> to vector<4x64xf32>
    %67 = arith.addf %65, %66 : vector<4x64xf32>
    %68 = arith.negf %67 : vector<4x64xf32>
    %69 = math.exp %68 : vector<4x64xf32>
    %cst_23 = arith.constant 1.000000e+00 : f32
    %70 = vector.broadcast %cst_23 : f32 to vector<4x64xf32>
    %71 = arith.addf %70, %69 : vector<4x64xf32>
    %72 = arith.divf %70, %71 : vector<4x64xf32>
    %73 = vector.extract_strided_slice %56 {offsets = [0, 128], sizes = [4, 64], strides = [1, 1]} : vector<4x192xf32> to vector<4x64xf32>
    %74 = vector.extract_strided_slice %55 {offsets = [0, 128], sizes = [4, 64], strides = [1, 1]} : vector<4x192xf32> to vector<4x64xf32>
    %75 = vector.broadcast %8 : vector<1x64xf32> to vector<4x64xf32>
    %76 = arith.addf %74, %75 : vector<4x64xf32>
    %77 = arith.mulf %64, %76 : vector<4x64xf32>
    %78 = arith.addf %73, %77 : vector<4x64xf32>
    %79 = math.tanh %78 : vector<4x64xf32>
    %cst_24 = arith.constant 1.000000e+00 : f32
    %80 = vector.broadcast %cst_24 : f32 to vector<4x64xf32>
    %81 = arith.subf %80, %72 : vector<4x64xf32>
    %82 = arith.mulf %81, %79 : vector<4x64xf32>
    %83 = arith.mulf %72, %53 : vector<4x64xf32>
    %84 = arith.addf %82, %83 : vector<4x64xf32>
    %c2 = arith.constant 2 : index
    %c0_25 = arith.constant 0 : index
    %c0_26 = arith.constant 0 : index
    %85 = vector.load %arg1[%c2, %c0_25, %c0_26] : memref<10x4x1xi32, #tpu.memory_space<vmem>>, vector<1x4x1xi32>
    %86 = vector.shape_cast %85 : vector<1x4x1xi32> to vector<4x1xi32>
    %c1_i32_27 = arith.constant 1 : i32
    %87 = vector.broadcast %c1_i32_27 : i32 to vector<4x1xi32>
    %88 = arith.cmpi eq, %86, %87 : vector<4x1xi32>
    %89 = vector.shape_cast %88 : vector<4x1xi1> to vector<4x1xi1>
    %90 = vector.broadcast %89 : vector<4x1xi1> to vector<4x64xi1>
    %91 = arith.select %90, %84, %6 : vector<4x64xi1>, vector<4x64xf32>
    %92 = arith.truncf %91 : vector<4x64xf32> to vector<4x64xbf16>
    %cst_28 = arith.constant dense<0.000000e+00> : vector<4x192xf32>
    %93 = tpu.matmul %92, %7, %cst_28 {dimension_numbers = #tpu.dot_dimension_numbers<[1], [0], [0], [1], [0, 0, 1, 1], [], []>} : vector<4x64xbf16>, vector<64x192xbf16>, vector<4x192xf32> -> vector<4x192xf32>
    %94 = vector.extract_strided_slice %5 {offsets = [8, 0], sizes = [4, 192], strides = [1, 1]} : vector<40x192xf32> to vector<4x192xf32>
    %95 = vector.extract_strided_slice %94 {offsets = [0, 0], sizes = [4, 64], strides = [1, 1]} : vector<4x192xf32> to vector<4x64xf32>
    %96 = vector.extract_strided_slice %93 {offsets = [0, 0], sizes = [4, 64], strides = [1, 1]} : vector<4x192xf32> to vector<4x64xf32>
    %97 = arith.addf %95, %96 : vector<4x64xf32>
    %98 = arith.negf %97 : vector<4x64xf32>
    %99 = math.exp %98 : vector<4x64xf32>
    %cst_29 = arith.constant 1.000000e+00 : f32
    %100 = vector.broadcast %cst_29 : f32 to vector<4x64xf32>
    %101 = arith.addf %100, %99 : vector<4x64xf32>
    %102 = arith.divf %100, %101 : vector<4x64xf32>
    %103 = vector.extract_strided_slice %94 {offsets = [0, 64], sizes = [4, 64], strides = [1, 1]} : vector<4x192xf32> to vector<4x64xf32>
    %104 = vector.extract_strided_slice %93 {offsets = [0, 64], sizes = [4, 64], strides = [1, 1]} : vector<4x192xf32> to vector<4x64xf32>
    %105 = arith.addf %103, %104 : vector<4x64xf32>
    %106 = arith.negf %105 : vector<4x64xf32>
    %107 = math.exp %106 : vector<4x64xf32>
    %cst_30 = arith.constant 1.000000e+00 : f32
    %108 = vector.broadcast %cst_30 : f32 to vector<4x64xf32>
    %109 = arith.addf %108, %107 : vector<4x64xf32>
    %110 = arith.divf %108, %109 : vector<4x64xf32>
    %111 = vector.extract_strided_slice %94 {offsets = [0, 128], sizes = [4, 64], strides = [1, 1]} : vector<4x192xf32> to vector<4x64xf32>
    %112 = vector.extract_strided_slice %93 {offsets = [0, 128], sizes = [4, 64], strides = [1, 1]} : vector<4x192xf32> to vector<4x64xf32>
    %113 = vector.broadcast %8 : vector<1x64xf32> to vector<4x64xf32>
    %114 = arith.addf %112, %113 : vector<4x64xf32>
    %115 = arith.mulf %102, %114 : vector<4x64xf32>
    %116 = arith.addf %111, %115 : vector<4x64xf32>
    %117 = math.tanh %116 : vector<4x64xf32>
    %cst_31 = arith.constant 1.000000e+00 : f32
    %118 = vector.broadcast %cst_31 : f32 to vector<4x64xf32>
    %119 = arith.subf %118, %110 : vector<4x64xf32>
    %120 = arith.mulf %119, %117 : vector<4x64xf32>
    %121 = arith.mulf %110, %91 : vector<4x64xf32>
    %122 = arith.addf %120, %121 : vector<4x64xf32>
    %c3 = arith.constant 3 : index
    %c0_32 = arith.constant 0 : index
    %c0_33 = arith.constant 0 : index
    %123 = vector.load %arg1[%c3, %c0_32, %c0_33] : memref<10x4x1xi32, #tpu.memory_space<vmem>>, vector<1x4x1xi32>
    %124 = vector.shape_cast %123 : vector<1x4x1xi32> to vector<4x1xi32>
    %c1_i32_34 = arith.constant 1 : i32
    %125 = vector.broadcast %c1_i32_34 : i32 to vector<4x1xi32>
    %126 = arith.cmpi eq, %124, %125 : vector<4x1xi32>
    %127 = vector.shape_cast %126 : vector<4x1xi1> to vector<4x1xi1>
    %128 = vector.broadcast %127 : vector<4x1xi1> to vector<4x64xi1>
    %129 = arith.select %128, %122, %6 : vector<4x64xi1>, vector<4x64xf32>
    %130 = arith.truncf %129 : vector<4x64xf32> to vector<4x64xbf16>
    %cst_35 = arith.constant dense<0.000000e+00> : vector<4x192xf32>
    %131 = tpu.matmul %130, %7, %cst_35 {dimension_numbers = #tpu.dot_dimension_numbers<[1], [0], [0], [1], [0, 0, 1, 1], [], []>} : vector<4x64xbf16>, vector<64x192xbf16>, vector<4x192xf32> -> vector<4x192xf32>
    %132 = vector.extract_strided_slice %5 {offsets = [12, 0], sizes = [4, 192], strides = [1, 1]} : vector<40x192xf32> to vector<4x192xf32>
    %133 = vector.extract_strided_slice %132 {offsets = [0, 0], sizes = [4, 64], strides = [1, 1]} : vector<4x192xf32> to vector<4x64xf32>
    %134 = vector.extract_strided_slice %131 {offsets = [0, 0], sizes = [4, 64], strides = [1, 1]} : vector<4x192xf32> to vector<4x64xf32>
    %135 = arith.addf %133, %134 : vector<4x64xf32>
    %136 = arith.negf %135 : vector<4x64xf32>
    %137 = math.exp %136 : vector<4x64xf32>
    %cst_36 = arith.constant 1.000000e+00 : f32
    %138 = vector.broadcast %cst_36 : f32 to vector<4x64xf32>
    %139 = arith.addf %138, %137 : vector<4x64xf32>
    %140 = arith.divf %138, %139 : vector<4x64xf32>
    %141 = vector.extract_strided_slice %132 {offsets = [0, 64], sizes = [4, 64], strides = [1, 1]} : vector<4x192xf32> to vector<4x64xf32>
    %142 = vector.extract_strided_slice %131 {offsets = [0, 64], sizes = [4, 64], strides = [1, 1]} : vector<4x192xf32> to vector<4x64xf32>
    %143 = arith.addf %141, %142 : vector<4x64xf32>
    %144 = arith.negf %143 : vector<4x64xf32>
    %145 = math.exp %144 : vector<4x64xf32>
    %cst_37 = arith.constant 1.000000e+00 : f32
    %146 = vector.broadcast %cst_37 : f32 to vector<4x64xf32>
    %147 = arith.addf %146, %145 : vector<4x64xf32>
    %148 = arith.divf %146, %147 : vector<4x64xf32>
    %149 = vector.extract_strided_slice %132 {offsets = [0, 128], sizes = [4, 64], strides = [1, 1]} : vector<4x192xf32> to vector<4x64xf32>
    %150 = vector.extract_strided_slice %131 {offsets = [0, 128], sizes = [4, 64], strides = [1, 1]} : vector<4x192xf32> to vector<4x64xf32>
    %151 = vector.broadcast %8 : vector<1x64xf32> to vector<4x64xf32>
    %152 = arith.addf %150, %151 : vector<4x64xf32>
    %153 = arith.mulf %140, %152 : vector<4x64xf32>
    %154 = arith.addf %149, %153 : vector<4x64xf32>
    %155 = math.tanh %154 : vector<4x64xf32>
    %cst_38 = arith.constant 1.000000e+00 : f32
    %156 = vector.broadcast %cst_38 : f32 to vector<4x64xf32>
    %157 = arith.subf %156, %148 : vector<4x64xf32>
    %158 = arith.mulf %157, %155 : vector<4x64xf32>
    %159 = arith.mulf %148, %129 : vector<4x64xf32>
    %160 = arith.addf %158, %159 : vector<4x64xf32>
    %c4 = arith.constant 4 : index
    %c0_39 = arith.constant 0 : index
    %c0_40 = arith.constant 0 : index
    %161 = vector.load %arg1[%c4, %c0_39, %c0_40] : memref<10x4x1xi32, #tpu.memory_space<vmem>>, vector<1x4x1xi32>
    %162 = vector.shape_cast %161 : vector<1x4x1xi32> to vector<4x1xi32>
    %c1_i32_41 = arith.constant 1 : i32
    %163 = vector.broadcast %c1_i32_41 : i32 to vector<4x1xi32>
    %164 = arith.cmpi eq, %162, %163 : vector<4x1xi32>
    %165 = vector.shape_cast %164 : vector<4x1xi1> to vector<4x1xi1>
    %166 = vector.broadcast %165 : vector<4x1xi1> to vector<4x64xi1>
    %167 = arith.select %166, %160, %6 : vector<4x64xi1>, vector<4x64xf32>
    %168 = arith.truncf %167 : vector<4x64xf32> to vector<4x64xbf16>
    %cst_42 = arith.constant dense<0.000000e+00> : vector<4x192xf32>
    %169 = tpu.matmul %168, %7, %cst_42 {dimension_numbers = #tpu.dot_dimension_numbers<[1], [0], [0], [1], [0, 0, 1, 1], [], []>} : vector<4x64xbf16>, vector<64x192xbf16>, vector<4x192xf32> -> vector<4x192xf32>
    %170 = vector.extract_strided_slice %5 {offsets = [16, 0], sizes = [4, 192], strides = [1, 1]} : vector<40x192xf32> to vector<4x192xf32>
    %171 = vector.extract_strided_slice %170 {offsets = [0, 0], sizes = [4, 64], strides = [1, 1]} : vector<4x192xf32> to vector<4x64xf32>
    %172 = vector.extract_strided_slice %169 {offsets = [0, 0], sizes = [4, 64], strides = [1, 1]} : vector<4x192xf32> to vector<4x64xf32>
    %173 = arith.addf %171, %172 : vector<4x64xf32>
    %174 = arith.negf %173 : vector<4x64xf32>
    %175 = math.exp %174 : vector<4x64xf32>
    %cst_43 = arith.constant 1.000000e+00 : f32
    %176 = vector.broadcast %cst_43 : f32 to vector<4x64xf32>
    %177 = arith.addf %176, %175 : vector<4x64xf32>
    %178 = arith.divf %176, %177 : vector<4x64xf32>
    %179 = vector.extract_strided_slice %170 {offsets = [0, 64], sizes = [4, 64], strides = [1, 1]} : vector<4x192xf32> to vector<4x64xf32>
    %180 = vector.extract_strided_slice %169 {offsets = [0, 64], sizes = [4, 64], strides = [1, 1]} : vector<4x192xf32> to vector<4x64xf32>
    %181 = arith.addf %179, %180 : vector<4x64xf32>
    %182 = arith.negf %181 : vector<4x64xf32>
    %183 = math.exp %182 : vector<4x64xf32>
    %cst_44 = arith.constant 1.000000e+00 : f32
    %184 = vector.broadcast %cst_44 : f32 to vector<4x64xf32>
    %185 = arith.addf %184, %183 : vector<4x64xf32>
    %186 = arith.divf %184, %185 : vector<4x64xf32>
    %187 = vector.extract_strided_slice %170 {offsets = [0, 128], sizes = [4, 64], strides = [1, 1]} : vector<4x192xf32> to vector<4x64xf32>
    %188 = vector.extract_strided_slice %169 {offsets = [0, 128], sizes = [4, 64], strides = [1, 1]} : vector<4x192xf32> to vector<4x64xf32>
    %189 = vector.broadcast %8 : vector<1x64xf32> to vector<4x64xf32>
    %190 = arith.addf %188, %189 : vector<4x64xf32>
    %191 = arith.mulf %178, %190 : vector<4x64xf32>
    %192 = arith.addf %187, %191 : vector<4x64xf32>
    %193 = math.tanh %192 : vector<4x64xf32>
    %cst_45 = arith.constant 1.000000e+00 : f32
    %194 = vector.broadcast %cst_45 : f32 to vector<4x64xf32>
    %195 = arith.subf %194, %186 : vector<4x64xf32>
    %196 = arith.mulf %195, %193 : vector<4x64xf32>
    %197 = arith.mulf %186, %167 : vector<4x64xf32>
    %198 = arith.addf %196, %197 : vector<4x64xf32>
    %c5 = arith.constant 5 : index
    %c0_46 = arith.constant 0 : index
    %c0_47 = arith.constant 0 : index
    %199 = vector.load %arg1[%c5, %c0_46, %c0_47] : memref<10x4x1xi32, #tpu.memory_space<vmem>>, vector<1x4x1xi32>
    %200 = vector.shape_cast %199 : vector<1x4x1xi32> to vector<4x1xi32>
    %c1_i32_48 = arith.constant 1 : i32
    %201 = vector.broadcast %c1_i32_48 : i32 to vector<4x1xi32>
    %202 = arith.cmpi eq, %200, %201 : vector<4x1xi32>
    %203 = vector.shape_cast %202 : vector<4x1xi1> to vector<4x1xi1>
    %204 = vector.broadcast %203 : vector<4x1xi1> to vector<4x64xi1>
    %205 = arith.select %204, %198, %6 : vector<4x64xi1>, vector<4x64xf32>
    %206 = arith.truncf %205 : vector<4x64xf32> to vector<4x64xbf16>
    %cst_49 = arith.constant dense<0.000000e+00> : vector<4x192xf32>
    %207 = tpu.matmul %206, %7, %cst_49 {dimension_numbers = #tpu.dot_dimension_numbers<[1], [0], [0], [1], [0, 0, 1, 1], [], []>} : vector<4x64xbf16>, vector<64x192xbf16>, vector<4x192xf32> -> vector<4x192xf32>
    %208 = vector.extract_strided_slice %5 {offsets = [20, 0], sizes = [4, 192], strides = [1, 1]} : vector<40x192xf32> to vector<4x192xf32>
    %209 = vector.extract_strided_slice %208 {offsets = [0, 0], sizes = [4, 64], strides = [1, 1]} : vector<4x192xf32> to vector<4x64xf32>
    %210 = vector.extract_strided_slice %207 {offsets = [0, 0], sizes = [4, 64], strides = [1, 1]} : vector<4x192xf32> to vector<4x64xf32>
    %211 = arith.addf %209, %210 : vector<4x64xf32>
    %212 = arith.negf %211 : vector<4x64xf32>
    %213 = math.exp %212 : vector<4x64xf32>
    %cst_50 = arith.constant 1.000000e+00 : f32
    %214 = vector.broadcast %cst_50 : f32 to vector<4x64xf32>
    %215 = arith.addf %214, %213 : vector<4x64xf32>
    %216 = arith.divf %214, %215 : vector<4x64xf32>
    %217 = vector.extract_strided_slice %208 {offsets = [0, 64], sizes = [4, 64], strides = [1, 1]} : vector<4x192xf32> to vector<4x64xf32>
    %218 = vector.extract_strided_slice %207 {offsets = [0, 64], sizes = [4, 64], strides = [1, 1]} : vector<4x192xf32> to vector<4x64xf32>
    %219 = arith.addf %217, %218 : vector<4x64xf32>
    %220 = arith.negf %219 : vector<4x64xf32>
    %221 = math.exp %220 : vector<4x64xf32>
    %cst_51 = arith.constant 1.000000e+00 : f32
    %222 = vector.broadcast %cst_51 : f32 to vector<4x64xf32>
    %223 = arith.addf %222, %221 : vector<4x64xf32>
    %224 = arith.divf %222, %223 : vector<4x64xf32>
    %225 = vector.extract_strided_slice %208 {offsets = [0, 128], sizes = [4, 64], strides = [1, 1]} : vector<4x192xf32> to vector<4x64xf32>
    %226 = vector.extract_strided_slice %207 {offsets = [0, 128], sizes = [4, 64], strides = [1, 1]} : vector<4x192xf32> to vector<4x64xf32>
    %227 = vector.broadcast %8 : vector<1x64xf32> to vector<4x64xf32>
    %228 = arith.addf %226, %227 : vector<4x64xf32>
    %229 = arith.mulf %216, %228 : vector<4x64xf32>
    %230 = arith.addf %225, %229 : vector<4x64xf32>
    %231 = math.tanh %230 : vector<4x64xf32>
    %cst_52 = arith.constant 1.000000e+00 : f32
    %232 = vector.broadcast %cst_52 : f32 to vector<4x64xf32>
    %233 = arith.subf %232, %224 : vector<4x64xf32>
    %234 = arith.mulf %233, %231 : vector<4x64xf32>
    %235 = arith.mulf %224, %205 : vector<4x64xf32>
    %236 = arith.addf %234, %235 : vector<4x64xf32>
    %c6 = arith.constant 6 : index
    %c0_53 = arith.constant 0 : index
    %c0_54 = arith.constant 0 : index
    %237 = vector.load %arg1[%c6, %c0_53, %c0_54] : memref<10x4x1xi32, #tpu.memory_space<vmem>>, vector<1x4x1xi32>
    %238 = vector.shape_cast %237 : vector<1x4x1xi32> to vector<4x1xi32>
    %c1_i32_55 = arith.constant 1 : i32
    %239 = vector.broadcast %c1_i32_55 : i32 to vector<4x1xi32>
    %240 = arith.cmpi eq, %238, %239 : vector<4x1xi32>
    %241 = vector.shape_cast %240 : vector<4x1xi1> to vector<4x1xi1>
    %242 = vector.broadcast %241 : vector<4x1xi1> to vector<4x64xi1>
    %243 = arith.select %242, %236, %6 : vector<4x64xi1>, vector<4x64xf32>
    %244 = arith.truncf %243 : vector<4x64xf32> to vector<4x64xbf16>
    %cst_56 = arith.constant dense<0.000000e+00> : vector<4x192xf32>
    %245 = tpu.matmul %244, %7, %cst_56 {dimension_numbers = #tpu.dot_dimension_numbers<[1], [0], [0], [1], [0, 0, 1, 1], [], []>} : vector<4x64xbf16>, vector<64x192xbf16>, vector<4x192xf32> -> vector<4x192xf32>
    %246 = vector.extract_strided_slice %5 {offsets = [24, 0], sizes = [4, 192], strides = [1, 1]} : vector<40x192xf32> to vector<4x192xf32>
    %247 = vector.extract_strided_slice %246 {offsets = [0, 0], sizes = [4, 64], strides = [1, 1]} : vector<4x192xf32> to vector<4x64xf32>
    %248 = vector.extract_strided_slice %245 {offsets = [0, 0], sizes = [4, 64], strides = [1, 1]} : vector<4x192xf32> to vector<4x64xf32>
    %249 = arith.addf %247, %248 : vector<4x64xf32>
    %250 = arith.negf %249 : vector<4x64xf32>
    %251 = math.exp %250 : vector<4x64xf32>
    %cst_57 = arith.constant 1.000000e+00 : f32
    %252 = vector.broadcast %cst_57 : f32 to vector<4x64xf32>
    %253 = arith.addf %252, %251 : vector<4x64xf32>
    %254 = arith.divf %252, %253 : vector<4x64xf32>
    %255 = vector.extract_strided_slice %246 {offsets = [0, 64], sizes = [4, 64], strides = [1, 1]} : vector<4x192xf32> to vector<4x64xf32>
    %256 = vector.extract_strided_slice %245 {offsets = [0, 64], sizes = [4, 64], strides = [1, 1]} : vector<4x192xf32> to vector<4x64xf32>
    %257 = arith.addf %255, %256 : vector<4x64xf32>
    %258 = arith.negf %257 : vector<4x64xf32>
    %259 = math.exp %258 : vector<4x64xf32>
    %cst_58 = arith.constant 1.000000e+00 : f32
    %260 = vector.broadcast %cst_58 : f32 to vector<4x64xf32>
    %261 = arith.addf %260, %259 : vector<4x64xf32>
    %262 = arith.divf %260, %261 : vector<4x64xf32>
    %263 = vector.extract_strided_slice %246 {offsets = [0, 128], sizes = [4, 64], strides = [1, 1]} : vector<4x192xf32> to vector<4x64xf32>
    %264 = vector.extract_strided_slice %245 {offsets = [0, 128], sizes = [4, 64], strides = [1, 1]} : vector<4x192xf32> to vector<4x64xf32>
    %265 = vector.broadcast %8 : vector<1x64xf32> to vector<4x64xf32>
    %266 = arith.addf %264, %265 : vector<4x64xf32>
    %267 = arith.mulf %254, %266 : vector<4x64xf32>
    %268 = arith.addf %263, %267 : vector<4x64xf32>
    %269 = math.tanh %268 : vector<4x64xf32>
    %cst_59 = arith.constant 1.000000e+00 : f32
    %270 = vector.broadcast %cst_59 : f32 to vector<4x64xf32>
    %271 = arith.subf %270, %262 : vector<4x64xf32>
    %272 = arith.mulf %271, %269 : vector<4x64xf32>
    %273 = arith.mulf %262, %243 : vector<4x64xf32>
    %274 = arith.addf %272, %273 : vector<4x64xf32>
    %c7 = arith.constant 7 : index
    %c0_60 = arith.constant 0 : index
    %c0_61 = arith.constant 0 : index
    %275 = vector.load %arg1[%c7, %c0_60, %c0_61] : memref<10x4x1xi32, #tpu.memory_space<vmem>>, vector<1x4x1xi32>
    %276 = vector.shape_cast %275 : vector<1x4x1xi32> to vector<4x1xi32>
    %c1_i32_62 = arith.constant 1 : i32
    %277 = vector.broadcast %c1_i32_62 : i32 to vector<4x1xi32>
    %278 = arith.cmpi eq, %276, %277 : vector<4x1xi32>
    %279 = vector.shape_cast %278 : vector<4x1xi1> to vector<4x1xi1>
    %280 = vector.broadcast %279 : vector<4x1xi1> to vector<4x64xi1>
    %281 = arith.select %280, %274, %6 : vector<4x64xi1>, vector<4x64xf32>
    %282 = arith.truncf %281 : vector<4x64xf32> to vector<4x64xbf16>
    %cst_63 = arith.constant dense<0.000000e+00> : vector<4x192xf32>
    %283 = tpu.matmul %282, %7, %cst_63 {dimension_numbers = #tpu.dot_dimension_numbers<[1], [0], [0], [1], [0, 0, 1, 1], [], []>} : vector<4x64xbf16>, vector<64x192xbf16>, vector<4x192xf32> -> vector<4x192xf32>
    %284 = vector.extract_strided_slice %5 {offsets = [28, 0], sizes = [4, 192], strides = [1, 1]} : vector<40x192xf32> to vector<4x192xf32>
    %285 = vector.extract_strided_slice %284 {offsets = [0, 0], sizes = [4, 64], strides = [1, 1]} : vector<4x192xf32> to vector<4x64xf32>
    %286 = vector.extract_strided_slice %283 {offsets = [0, 0], sizes = [4, 64], strides = [1, 1]} : vector<4x192xf32> to vector<4x64xf32>
    %287 = arith.addf %285, %286 : vector<4x64xf32>
    %288 = arith.negf %287 : vector<4x64xf32>
    %289 = math.exp %288 : vector<4x64xf32>
    %cst_64 = arith.constant 1.000000e+00 : f32
    %290 = vector.broadcast %cst_64 : f32 to vector<4x64xf32>
    %291 = arith.addf %290, %289 : vector<4x64xf32>
    %292 = arith.divf %290, %291 : vector<4x64xf32>
    %293 = vector.extract_strided_slice %284 {offsets = [0, 64], sizes = [4, 64], strides = [1, 1]} : vector<4x192xf32> to vector<4x64xf32>
    %294 = vector.extract_strided_slice %283 {offsets = [0, 64], sizes = [4, 64], strides = [1, 1]} : vector<4x192xf32> to vector<4x64xf32>
    %295 = arith.addf %293, %294 : vector<4x64xf32>
    %296 = arith.negf %295 : vector<4x64xf32>
    %297 = math.exp %296 : vector<4x64xf32>
    %cst_65 = arith.constant 1.000000e+00 : f32
    %298 = vector.broadcast %cst_65 : f32 to vector<4x64xf32>
    %299 = arith.addf %298, %297 : vector<4x64xf32>
    %300 = arith.divf %298, %299 : vector<4x64xf32>
    %301 = vector.extract_strided_slice %284 {offsets = [0, 128], sizes = [4, 64], strides = [1, 1]} : vector<4x192xf32> to vector<4x64xf32>
    %302 = vector.extract_strided_slice %283 {offsets = [0, 128], sizes = [4, 64], strides = [1, 1]} : vector<4x192xf32> to vector<4x64xf32>
    %303 = vector.broadcast %8 : vector<1x64xf32> to vector<4x64xf32>
    %304 = arith.addf %302, %303 : vector<4x64xf32>
    %305 = arith.mulf %292, %304 : vector<4x64xf32>
    %306 = arith.addf %301, %305 : vector<4x64xf32>
    %307 = math.tanh %306 : vector<4x64xf32>
    %cst_66 = arith.constant 1.000000e+00 : f32
    %308 = vector.broadcast %cst_66 : f32 to vector<4x64xf32>
    %309 = arith.subf %308, %300 : vector<4x64xf32>
    %310 = arith.mulf %309, %307 : vector<4x64xf32>
    %311 = arith.mulf %300, %281 : vector<4x64xf32>
    %312 = arith.addf %310, %311 : vector<4x64xf32>
    %c8 = arith.constant 8 : index
    %c0_67 = arith.constant 0 : index
    %c0_68 = arith.constant 0 : index
    %313 = vector.load %arg1[%c8, %c0_67, %c0_68] : memref<10x4x1xi32, #tpu.memory_space<vmem>>, vector<1x4x1xi32>
    %314 = vector.shape_cast %313 : vector<1x4x1xi32> to vector<4x1xi32>
    %c1_i32_69 = arith.constant 1 : i32
    %315 = vector.broadcast %c1_i32_69 : i32 to vector<4x1xi32>
    %316 = arith.cmpi eq, %314, %315 : vector<4x1xi32>
    %317 = vector.shape_cast %316 : vector<4x1xi1> to vector<4x1xi1>
    %318 = vector.broadcast %317 : vector<4x1xi1> to vector<4x64xi1>
    %319 = arith.select %318, %312, %6 : vector<4x64xi1>, vector<4x64xf32>
    %320 = arith.truncf %319 : vector<4x64xf32> to vector<4x64xbf16>
    %cst_70 = arith.constant dense<0.000000e+00> : vector<4x192xf32>
    %321 = tpu.matmul %320, %7, %cst_70 {dimension_numbers = #tpu.dot_dimension_numbers<[1], [0], [0], [1], [0, 0, 1, 1], [], []>} : vector<4x64xbf16>, vector<64x192xbf16>, vector<4x192xf32> -> vector<4x192xf32>
    %322 = vector.extract_strided_slice %5 {offsets = [32, 0], sizes = [4, 192], strides = [1, 1]} : vector<40x192xf32> to vector<4x192xf32>
    %323 = vector.extract_strided_slice %322 {offsets = [0, 0], sizes = [4, 64], strides = [1, 1]} : vector<4x192xf32> to vector<4x64xf32>
    %324 = vector.extract_strided_slice %321 {offsets = [0, 0], sizes = [4, 64], strides = [1, 1]} : vector<4x192xf32> to vector<4x64xf32>
    %325 = arith.addf %323, %324 : vector<4x64xf32>
    %326 = arith.negf %325 : vector<4x64xf32>
    %327 = math.exp %326 : vector<4x64xf32>
    %cst_71 = arith.constant 1.000000e+00 : f32
    %328 = vector.broadcast %cst_71 : f32 to vector<4x64xf32>
    %329 = arith.addf %328, %327 : vector<4x64xf32>
    %330 = arith.divf %328, %329 : vector<4x64xf32>
    %331 = vector.extract_strided_slice %322 {offsets = [0, 64], sizes = [4, 64], strides = [1, 1]} : vector<4x192xf32> to vector<4x64xf32>
    %332 = vector.extract_strided_slice %321 {offsets = [0, 64], sizes = [4, 64], strides = [1, 1]} : vector<4x192xf32> to vector<4x64xf32>
    %333 = arith.addf %331, %332 : vector<4x64xf32>
    %334 = arith.negf %333 : vector<4x64xf32>
    %335 = math.exp %334 : vector<4x64xf32>
    %cst_72 = arith.constant 1.000000e+00 : f32
    %336 = vector.broadcast %cst_72 : f32 to vector<4x64xf32>
    %337 = arith.addf %336, %335 : vector<4x64xf32>
    %338 = arith.divf %336, %337 : vector<4x64xf32>
    %339 = vector.extract_strided_slice %322 {offsets = [0, 128], sizes = [4, 64], strides = [1, 1]} : vector<4x192xf32> to vector<4x64xf32>
    %340 = vector.extract_strided_slice %321 {offsets = [0, 128], sizes = [4, 64], strides = [1, 1]} : vector<4x192xf32> to vector<4x64xf32>
    %341 = vector.broadcast %8 : vector<1x64xf32> to vector<4x64xf32>
    %342 = arith.addf %340, %341 : vector<4x64xf32>
    %343 = arith.mulf %330, %342 : vector<4x64xf32>
    %344 = arith.addf %339, %343 : vector<4x64xf32>
    %345 = math.tanh %344 : vector<4x64xf32>
    %cst_73 = arith.constant 1.000000e+00 : f32
    %346 = vector.broadcast %cst_73 : f32 to vector<4x64xf32>
    %347 = arith.subf %346, %338 : vector<4x64xf32>
    %348 = arith.mulf %347, %345 : vector<4x64xf32>
    %349 = arith.mulf %338, %319 : vector<4x64xf32>
    %350 = arith.addf %348, %349 : vector<4x64xf32>
    %c9 = arith.constant 9 : index
    %c0_74 = arith.constant 0 : index
    %c0_75 = arith.constant 0 : index
    %351 = vector.load %arg1[%c9, %c0_74, %c0_75] : memref<10x4x1xi32, #tpu.memory_space<vmem>>, vector<1x4x1xi32>
    %352 = vector.shape_cast %351 : vector<1x4x1xi32> to vector<4x1xi32>
    %c1_i32_76 = arith.constant 1 : i32
    %353 = vector.broadcast %c1_i32_76 : i32 to vector<4x1xi32>
    %354 = arith.cmpi eq, %352, %353 : vector<4x1xi32>
    %355 = vector.shape_cast %354 : vector<4x1xi1> to vector<4x1xi1>
    %356 = vector.broadcast %355 : vector<4x1xi1> to vector<4x64xi1>
    %357 = arith.select %356, %350, %6 : vector<4x64xi1>, vector<4x64xf32>
    %358 = arith.truncf %357 : vector<4x64xf32> to vector<4x64xbf16>
    %cst_77 = arith.constant dense<0.000000e+00> : vector<4x192xf32>
    %359 = tpu.matmul %358, %7, %cst_77 {dimension_numbers = #tpu.dot_dimension_numbers<[1], [0], [0], [1], [0, 0, 1, 1], [], []>} : vector<4x64xbf16>, vector<64x192xbf16>, vector<4x192xf32> -> vector<4x192xf32>
    %360 = vector.extract_strided_slice %5 {offsets = [36, 0], sizes = [4, 192], strides = [1, 1]} : vector<40x192xf32> to vector<4x192xf32>
    %361 = vector.extract_strided_slice %360 {offsets = [0, 0], sizes = [4, 64], strides = [1, 1]} : vector<4x192xf32> to vector<4x64xf32>
    %362 = vector.extract_strided_slice %359 {offsets = [0, 0], sizes = [4, 64], strides = [1, 1]} : vector<4x192xf32> to vector<4x64xf32>
    %363 = arith.addf %361, %362 : vector<4x64xf32>
    %364 = arith.negf %363 : vector<4x64xf32>
    %365 = math.exp %364 : vector<4x64xf32>
    %cst_78 = arith.constant 1.000000e+00 : f32
    %366 = vector.broadcast %cst_78 : f32 to vector<4x64xf32>
    %367 = arith.addf %366, %365 : vector<4x64xf32>
    %368 = arith.divf %366, %367 : vector<4x64xf32>
    %369 = vector.extract_strided_slice %360 {offsets = [0, 64], sizes = [4, 64], strides = [1, 1]} : vector<4x192xf32> to vector<4x64xf32>
    %370 = vector.extract_strided_slice %359 {offsets = [0, 64], sizes = [4, 64], strides = [1, 1]} : vector<4x192xf32> to vector<4x64xf32>
    %371 = arith.addf %369, %370 : vector<4x64xf32>
    %372 = arith.negf %371 : vector<4x64xf32>
    %373 = math.exp %372 : vector<4x64xf32>
    %cst_79 = arith.constant 1.000000e+00 : f32
    %374 = vector.broadcast %cst_79 : f32 to vector<4x64xf32>
    %375 = arith.addf %374, %373 : vector<4x64xf32>
    %376 = arith.divf %374, %375 : vector<4x64xf32>
    %377 = vector.extract_strided_slice %360 {offsets = [0, 128], sizes = [4, 64], strides = [1, 1]} : vector<4x192xf32> to vector<4x64xf32>
    %378 = vector.extract_strided_slice %359 {offsets = [0, 128], sizes = [4, 64], strides = [1, 1]} : vector<4x192xf32> to vector<4x64xf32>
    %379 = vector.broadcast %8 : vector<1x64xf32> to vector<4x64xf32>
    %380 = arith.addf %378, %379 : vector<4x64xf32>
    %381 = arith.mulf %368, %380 : vector<4x64xf32>
    %382 = arith.addf %377, %381 : vector<4x64xf32>
    %383 = math.tanh %382 : vector<4x64xf32>
    %cst_80 = arith.constant 1.000000e+00 : f32
    %384 = vector.broadcast %cst_80 : f32 to vector<4x64xf32>
    %385 = arith.subf %384, %376 : vector<4x64xf32>
    %386 = arith.mulf %385, %383 : vector<4x64xf32>
    %387 = arith.mulf %376, %357 : vector<4x64xf32>
    %388 = arith.addf %386, %387 : vector<4x64xf32>
    %389 = vector.extract_strided_slice %46 {offsets = [0, 0], sizes = [2, 64], strides = [1, 1]} : vector<4x64xf32> to vector<2x64xf32>
    %390 = vector.extract_strided_slice %388 {offsets = [2, 0], sizes = [2, 64], strides = [1, 1]} : vector<4x64xf32> to vector<2x64xf32>
    %391 = tpu.concatenate %389, %390 in 1 : vector<2x64xf32>, vector<2x64xf32> -> vector<2x128xf32>
    %c0_81 = arith.constant 0 : index
    %c0_82 = arith.constant 0 : index
    %c0_83 = arith.constant 0 : index
    %392 = vector.load %arg7[%c0_81, %c0_82, %c0_83] : memref<10x2x128xf32, #tpu.memory_space<vmem>>, vector<1x2x128xf32>
    %393 = vector.shape_cast %392 : vector<1x2x128xf32> to vector<2x128xf32>
    %394 = vector.shape_cast %391 : vector<2x128xf32> to vector<1x2x128xf32>
    tpu.vector_store %arg7[%c0_81, %c0_82, %c0_83], %394 {strides = array<i32>} : memref<10x2x128xf32, #tpu.memory_space<vmem>>, vector<1x2x128xf32>,
    %395 = vector.extract_strided_slice %84 {offsets = [0, 0], sizes = [2, 64], strides = [1, 1]} : vector<4x64xf32> to vector<2x64xf32>
    %396 = vector.extract_strided_slice %350 {offsets = [2, 0], sizes = [2, 64], strides = [1, 1]} : vector<4x64xf32> to vector<2x64xf32>
    %397 = tpu.concatenate %395, %396 in 1 : vector<2x64xf32>, vector<2x64xf32> -> vector<2x128xf32>
    %c1_84 = arith.constant 1 : index
    %c0_85 = arith.constant 0 : index
    %c0_86 = arith.constant 0 : index
    %398 = vector.load %arg7[%c1_84, %c0_85, %c0_86] : memref<10x2x128xf32, #tpu.memory_space<vmem>>, vector<1x2x128xf32>
    %399 = vector.shape_cast %398 : vector<1x2x128xf32> to vector<2x128xf32>
    %400 = vector.shape_cast %397 : vector<2x128xf32> to vector<1x2x128xf32>
    tpu.vector_store %arg7[%c1_84, %c0_85, %c0_86], %400 {strides = array<i32>} : memref<10x2x128xf32, #tpu.memory_space<vmem>>, vector<1x2x128xf32>,
    %401 = vector.extract_strided_slice %122 {offsets = [0, 0], sizes = [2, 64], strides = [1, 1]} : vector<4x64xf32> to vector<2x64xf32>
    %402 = vector.extract_strided_slice %312 {offsets = [2, 0], sizes = [2, 64], strides = [1, 1]} : vector<4x64xf32> to vector<2x64xf32>
    %403 = tpu.concatenate %401, %402 in 1 : vector<2x64xf32>, vector<2x64xf32> -> vector<2x128xf32>
    %c2_87 = arith.constant 2 : index
    %c0_88 = arith.constant 0 : index
    %c0_89 = arith.constant 0 : index
    %404 = vector.load %arg7[%c2_87, %c0_88, %c0_89] : memref<10x2x128xf32, #tpu.memory_space<vmem>>, vector<1x2x128xf32>
    %405 = vector.shape_cast %404 : vector<1x2x128xf32> to vector<2x128xf32>
    %406 = vector.shape_cast %403 : vector<2x128xf32> to vector<1x2x128xf32>
    tpu.vector_store %arg7[%c2_87, %c0_88, %c0_89], %406 {strides = array<i32>} : memref<10x2x128xf32, #tpu.memory_space<vmem>>, vector<1x2x128xf32>,
    %407 = vector.extract_strided_slice %160 {offsets = [0, 0], sizes = [2, 64], strides = [1, 1]} : vector<4x64xf32> to vector<2x64xf32>
    %408 = vector.extract_strided_slice %274 {offsets = [2, 0], sizes = [2, 64], strides = [1, 1]} : vector<4x64xf32> to vector<2x64xf32>
    %409 = tpu.concatenate %407, %408 in 1 : vector<2x64xf32>, vector<2x64xf32> -> vector<2x128xf32>
    %c3_90 = arith.constant 3 : index
    %c0_91 = arith.constant 0 : index
    %c0_92 = arith.constant 0 : index
    %410 = vector.load %arg7[%c3_90, %c0_91, %c0_92] : memref<10x2x128xf32, #tpu.memory_space<vmem>>, vector<1x2x128xf32>
    %411 = vector.shape_cast %410 : vector<1x2x128xf32> to vector<2x128xf32>
    %412 = vector.shape_cast %409 : vector<2x128xf32> to vector<1x2x128xf32>
    tpu.vector_store %arg7[%c3_90, %c0_91, %c0_92], %412 {strides = array<i32>} : memref<10x2x128xf32, #tpu.memory_space<vmem>>, vector<1x2x128xf32>,
    %413 = vector.extract_strided_slice %198 {offsets = [0, 0], sizes = [2, 64], strides = [1, 1]} : vector<4x64xf32> to vector<2x64xf32>
    %414 = vector.extract_strided_slice %236 {offsets = [2, 0], sizes = [2, 64], strides = [1, 1]} : vector<4x64xf32> to vector<2x64xf32>
    %415 = tpu.concatenate %413, %414 in 1 : vector<2x64xf32>, vector<2x64xf32> -> vector<2x128xf32>
    %c4_93 = arith.constant 4 : index
    %c0_94 = arith.constant 0 : index
    %c0_95 = arith.constant 0 : index
    %416 = vector.load %arg7[%c4_93, %c0_94, %c0_95] : memref<10x2x128xf32, #tpu.memory_space<vmem>>, vector<1x2x128xf32>
    %417 = vector.shape_cast %416 : vector<1x2x128xf32> to vector<2x128xf32>
    %418 = vector.shape_cast %415 : vector<2x128xf32> to vector<1x2x128xf32>
    tpu.vector_store %arg7[%c4_93, %c0_94, %c0_95], %418 {strides = array<i32>} : memref<10x2x128xf32, #tpu.memory_space<vmem>>, vector<1x2x128xf32>,
    %419 = vector.extract_strided_slice %236 {offsets = [0, 0], sizes = [2, 64], strides = [1, 1]} : vector<4x64xf32> to vector<2x64xf32>
    %420 = vector.extract_strided_slice %198 {offsets = [2, 0], sizes = [2, 64], strides = [1, 1]} : vector<4x64xf32> to vector<2x64xf32>
    %421 = tpu.concatenate %419, %420 in 1 : vector<2x64xf32>, vector<2x64xf32> -> vector<2x128xf32>
    %c5_96 = arith.constant 5 : index
    %c0_97 = arith.constant 0 : index
    %c0_98 = arith.constant 0 : index
    %422 = vector.load %arg7[%c5_96, %c0_97, %c0_98] : memref<10x2x128xf32, #tpu.memory_space<vmem>>, vector<1x2x128xf32>
    %423 = vector.shape_cast %422 : vector<1x2x128xf32> to vector<2x128xf32>
    %424 = vector.shape_cast %421 : vector<2x128xf32> to vector<1x2x128xf32>
    tpu.vector_store %arg7[%c5_96, %c0_97, %c0_98], %424 {strides = array<i32>} : memref<10x2x128xf32, #tpu.memory_space<vmem>>, vector<1x2x128xf32>,
    %425 = vector.extract_strided_slice %274 {offsets = [0, 0], sizes = [2, 64], strides = [1, 1]} : vector<4x64xf32> to vector<2x64xf32>
    %426 = vector.extract_strided_slice %160 {offsets = [2, 0], sizes = [2, 64], strides = [1, 1]} : vector<4x64xf32> to vector<2x64xf32>
    %427 = tpu.concatenate %425, %426 in 1 : vector<2x64xf32>, vector<2x64xf32> -> vector<2x128xf32>
    %c6_99 = arith.constant 6 : index
    %c0_100 = arith.constant 0 : index
    %c0_101 = arith.constant 0 : index
    %428 = vector.load %arg7[%c6_99, %c0_100, %c0_101] : memref<10x2x128xf32, #tpu.memory_space<vmem>>, vector<1x2x128xf32>
    %429 = vector.shape_cast %428 : vector<1x2x128xf32> to vector<2x128xf32>
    %430 = vector.shape_cast %427 : vector<2x128xf32> to vector<1x2x128xf32>
    tpu.vector_store %arg7[%c6_99, %c0_100, %c0_101], %430 {strides = array<i32>} : memref<10x2x128xf32, #tpu.memory_space<vmem>>, vector<1x2x128xf32>,
    %431 = vector.extract_strided_slice %312 {offsets = [0, 0], sizes = [2, 64], strides = [1, 1]} : vector<4x64xf32> to vector<2x64xf32>
    %432 = vector.extract_strided_slice %122 {offsets = [2, 0], sizes = [2, 64], strides = [1, 1]} : vector<4x64xf32> to vector<2x64xf32>
    %433 = tpu.concatenate %431, %432 in 1 : vector<2x64xf32>, vector<2x64xf32> -> vector<2x128xf32>
    %c7_102 = arith.constant 7 : index
    %c0_103 = arith.constant 0 : index
    %c0_104 = arith.constant 0 : index
    %434 = vector.load %arg7[%c7_102, %c0_103, %c0_104] : memref<10x2x128xf32, #tpu.memory_space<vmem>>, vector<1x2x128xf32>
    %435 = vector.shape_cast %434 : vector<1x2x128xf32> to vector<2x128xf32>
    %436 = vector.shape_cast %433 : vector<2x128xf32> to vector<1x2x128xf32>
    tpu.vector_store %arg7[%c7_102, %c0_103, %c0_104], %436 {strides = array<i32>} : memref<10x2x128xf32, #tpu.memory_space<vmem>>, vector<1x2x128xf32>,
    %437 = vector.extract_strided_slice %350 {offsets = [0, 0], sizes = [2, 64], strides = [1, 1]} : vector<4x64xf32> to vector<2x64xf32>
    %438 = vector.extract_strided_slice %84 {offsets = [2, 0], sizes = [2, 64], strides = [1, 1]} : vector<4x64xf32> to vector<2x64xf32>
    %439 = tpu.concatenate %437, %438 in 1 : vector<2x64xf32>, vector<2x64xf32> -> vector<2x128xf32>
    %c8_105 = arith.constant 8 : index
    %c0_106 = arith.constant 0 : index
    %c0_107 = arith.constant 0 : index
    %440 = vector.load %arg7[%c8_105, %c0_106, %c0_107] : memref<10x2x128xf32, #tpu.memory_space<vmem>>, vector<1x2x128xf32>
    %441 = vector.shape_cast %440 : vector<1x2x128xf32> to vector<2x128xf32>
    %442 = vector.shape_cast %439 : vector<2x128xf32> to vector<1x2x128xf32>
    tpu.vector_store %arg7[%c8_105, %c0_106, %c0_107], %442 {strides = array<i32>} : memref<10x2x128xf32, #tpu.memory_space<vmem>>, vector<1x2x128xf32>,
    %443 = vector.extract_strided_slice %388 {offsets = [0, 0], sizes = [2, 64], strides = [1, 1]} : vector<4x64xf32> to vector<2x64xf32>
    %444 = vector.extract_strided_slice %46 {offsets = [2, 0], sizes = [2, 64], strides = [1, 1]} : vector<4x64xf32> to vector<2x64xf32>
    %445 = tpu.concatenate %443, %444 in 1 : vector<2x64xf32>, vector<2x64xf32> -> vector<2x128xf32>
    %c9_108 = arith.constant 9 : index
    %c0_109 = arith.constant 0 : index
    %c0_110 = arith.constant 0 : index
    %446 = vector.load %arg7[%c9_108, %c0_109, %c0_110] : memref<10x2x128xf32, #tpu.memory_space<vmem>>, vector<1x2x128xf32>
    %447 = vector.shape_cast %446 : vector<1x2x128xf32> to vector<2x128xf32>
    %448 = vector.shape_cast %445 : vector<2x128xf32> to vector<1x2x128xf32>
    tpu.vector_store %arg7[%c9_108, %c0_109, %c0_110], %448 {strides = array<i32>} : memref<10x2x128xf32, #tpu.memory_space<vmem>>, vector<1x2x128xf32>,
    return
  }
}

</mosaic_0001>

<llo_original>
// kernel: persona_gru_forward.1
$region0: #{persona_gru_forward.1}
  #allocation0 [shape = 'u32[]', space=smem, size = 0x4, offset = 0x4, fixed_abs, tag = 'smem constant byte address 0x4 - core index']
  #allocation1 [shape = 'u32[144,128]{1,0:T(1,128)}', space=vmem, size = 0x12000, scoped, tag = 'internal scratch']
  %s0 = inlined_call_operand.vmem [shape: bf16[40,64], index: 0, kind: input, shape index: {}]
  %s1 = inlined_call_operand.vmem [shape: s32[10,4,1], index: 1, kind: input, shape index: {}]
  %s2 = inlined_call_operand.vmem [shape: f32[4,64], index: 2, kind: input, shape index: {}]
  %s3 = inlined_call_operand.vmem [shape: bf16[64,192], index: 3, kind: input, shape index: {}]
  %s4 = inlined_call_operand.vmem [shape: f32[1,192], index: 4, kind: input, shape index: {}]
  %s5 = inlined_call_operand.vmem [shape: bf16[64,192], index: 5, kind: input, shape index: {}]
  %s6 = inlined_call_operand.vmem [shape: f32[1,64], index: 6, kind: input, shape index: {}]
  %s7 = inlined_call_operand.hbm [shape: f32[10,2,128], index: 7, kind: output, shape index: {}]
  %s8 = sld [smem:[#allocation0]]
  $region38: #{persona_gru_forward.1} parent=0
    _
  %s10 = ssub.s32 1, %s8
  %s11 = scalar_select 0, %s10, %s8
  $region1: #{persona_gru_forward.1} parent=0
    #allocation2 [shape = 'u8[10240]{0}', space=vmem, size = 0x2800, scoped, tag = 'output window, operand 0, single buffered']
    #allocation3 [shape = 's32[1]{0}', space=sflag, size = 0x4, scoped, tag = 'scoped memory for persona_gru_forward.1']
    %12 = vsyncpa [#allocation3], 0
    // Predicated region
    $region2: #{persona_gru_forward.1} parent=1 // pred_check
      _
    $region3: #{persona_gru_forward.1} parent=1 // pred_check_branch
      %14 = sbr.rel (0) target = $region5
    $region4: #{persona_gru_forward.1} parent=1 // pred_region
      _
    $region5: #{persona_gru_forward.1} parent=1 // pred_fallthru
      _
    // Predicated region
    $region6: #{persona_gru_forward.1} parent=1 // pred_check
      _
    $region7: #{persona_gru_forward.1} parent=1 // pred_check_branch
      %16 = sbr.rel (0) target = $region9
    $region8: #{persona_gru_forward.1} parent=1 // pred_region
      _
    $region9: #{persona_gru_forward.1} parent=1 // pred_fallthru
      _
    // Predicated region
    $region10: #{persona_gru_forward.1} parent=1 // pred_check
      _
    $region11: #{persona_gru_forward.1} parent=1 // pred_check_branch
      %18 = sbr.rel (0) target = $region13
    $region12: #{persona_gru_forward.1} parent=1 // pred_region
      _
    $region13: #{persona_gru_forward.1} parent=1 // pred_fallthru
      _
    // Predicated region
    $region14: #{persona_gru_forward.1} parent=1 // pred_check
      _
    $region15: #{persona_gru_forward.1} parent=1 // pred_check_branch
      %20 = sbr.rel (0) target = $region17
    $region16: #{persona_gru_forward.1} parent=1 // pred_region
      _
    $region17: #{persona_gru_forward.1} parent=1 // pred_fallthru
      _
    // Predicated region
    $region18: #{persona_gru_forward.1} parent=1 // pred_check
      _
    $region19: #{persona_gru_forward.1} parent=1 // pred_check_branch
      %22 = sbr.rel (0) target = $region21
    $region20: #{persona_gru_forward.1} parent=1 // pred_region
      _
    $region21: #{persona_gru_forward.1} parent=1 // pred_fallthru
      _
    // Predicated region
    $region22: #{persona_gru_forward.1} parent=1 // pred_check
      _
    $region23: #{persona_gru_forward.1} parent=1 // pred_check_branch
      %24 = sbr.rel (0) target = $region25
    $region24: #{persona_gru_forward.1} parent=1 // pred_region
      _
    $region25: #{persona_gru_forward.1} parent=1 // pred_fallthru
      _
    // Predicated region
    $region26: #{persona_gru_forward.1} parent=1 // pred_check
      _
    $region27: #{persona_gru_forward.1} parent=1 // pred_check_branch
      %26 = sbr.rel (0) target = $region29
    $region28: #{persona_gru_forward.1} parent=1 // pred_region
      _
    $region29: #{persona_gru_forward.1} parent=1 // pred_fallthru
      _
    %v28 = vld [vmem:[%s0] sm:$0xf]
    %v29 = vld [vmem:[%s0 + $0x4] sm:$0xf]
    %v30 = vld [vmem:[%s0 + $0x8] sm:$0xf]
    %v31 = vld [vmem:[%s0 + $0xc] sm:$0xf]
    %v32 = vld [vmem:[%s0 + $0x10] sm:$0xf]
    %v33 = vld [vmem:[%s3] sm:$0xff]
    %v34 = vld [vmem:[%s3 + $0x8] sm:$0xff]
    %v35 = vld [vmem:[%s3 + $0x10] sm:$0xff]
    %v36 = vld [vmem:[%s3 + $0x18] sm:$0xff]
    %v37 = vld [vmem:[%s3 + $0x20] sm:$0xff]
    %v38 = vld [vmem:[%s3 + $0x28] sm:$0xff]
    %v39 = vld [vmem:[%s3 + $0x30] sm:$0xff]
    %v40 = vld [vmem:[%s3 + $0x38] sm:$0xff]
    %v41 = vld [vmem:[%s4] sm:$0x3]
    %v43 = vlaneseq
    %v44 = vshrl.u32 %v43, 7
    %v45 = vsub.s32 0, %v44
    %v46 = vrot.slane %v41, %v45
    %v47 = vlaneseq
    %v48 = vshrl.u32 %v47, 7
    %v49 = vsub.s32 1, %v48
    %v50 = vrot.slane %v41, %v49
    %v58 = vunpack.c.l.b16 %v28
    %v59 = vunpack.c.l.b16 %v29
    %v60 = vunpack.c.l.b16 %v30
    %v61 = vunpack.c.l.b16 %v31
    %v62 = vunpack.c.l.b16 %v32
    %v63 = vpack.c.b16 %v59, %v58
    %v64 = vpack.c.b16 %v61, %v60
    %v65 = vpack.c.b16 %v62, %v62
    %v74 = vunpack.c.l.b16 %v33
    %v75 = vunpack.c.h.b16 %v33
    %v76 = vunpack.c.l.b16 %v34
    %v77 = vunpack.c.h.b16 %v34
    %v78 = vunpack.c.l.b16 %v35
    %v79 = vunpack.c.h.b16 %v35
    %v80 = vunpack.c.l.b16 %v36
    %v81 = vunpack.c.h.b16 %v36
    %v82 = vunpack.c.l.b16 %v37
    %v83 = vunpack.c.h.b16 %v37
    %v84 = vunpack.c.l.b16 %v38
    %v85 = vunpack.c.h.b16 %v38
    %v86 = vunpack.c.l.b16 %v39
    %v87 = vunpack.c.h.b16 %v39
    %v88 = vunpack.c.l.b16 %v40
    %v89 = vunpack.c.h.b16 %v40
    %v90 = vpack.c.b16 %v76, %v74
    %v91 = vpack.c.b16 %v77, %v75
    %v92 = vpack.c.b16 %v80, %v78
    %v93 = vpack.c.b16 %v81, %v79
    %v94 = vpack.c.b16 %v84, %v82
    %v95 = vpack.c.b16 %v85, %v83
    %v96 = vpack.c.b16 %v88, %v86
    %v97 = vpack.c.b16 %v89, %v87
    %vm106 = vcmask 523264
    %v108 = vsel %vm106, %v63, 0
    %v111 = vsel %vm106, %v64, 0
    %v114 = vsel %vm106, %v65, 0
    %116 = vmatprep.subr.bf16.mxu0 0
    %117 = vmatpush1.bf16.msra.mxu0 0
    %118 = vmatprep.subr.bf16.mxu0 0
    %119 = vmatpush1.bf16.msra.mxu0 0
    %120 = vmatprep.subr.bf16.mxu0 0
    %121 = vmatpush1.bf16.msra.mxu0 0
    %122 = vmatprep.subr.bf16.mxu0 0
    %123 = vmatpush1.bf16.msra.mxu0 0
    %124 = vmatprep.subr.bf16.mxu0 %v97
    %125 = vmatpush1.bf16.msra.mxu0 %v96
    %126 = vmatprep.subr.bf16.mxu0 %v95
    %127 = vmatpush1.bf16.msra.mxu0 %v94
    %128 = vmatprep.subr.bf16.mxu0 %v93
    %129 = vmatpush1.bf16.msra.mxu0 %v92
    %130 = vmatprep.subr.bf16.mxu0 %v91
    %131 = vmatpush1.bf16.msra.mxu0 %v90
    %132 = vmatprep.subr.bf16.mxu0 0
    %133 = vmatpush2.bf16.msra.mxu0 0
    %134 = vmatprep.subr.bf16.mxu0 0
    %135 = vmatpush2.bf16.msra.mxu0 0
    %136 = vmatprep.subr.bf16.mxu0 0
    %137 = vmatpush2.bf16.msra.mxu0 0
    %138 = vmatprep.subr.bf16.mxu0 0
    %139 = vmatpush2.bf16.msra.mxu0 0
    %140 = vmatprep.subr.bf16.mxu0 0
    %141 = vmatpush2.bf16.msra.mxu0 0
    %142 = vmatprep.subr.bf16.mxu0 0
    %143 = vmatpush2.bf16.msra.mxu0 0
    %144 = vmatprep.subr.bf16.mxu0 0
    %145 = vmatpush2.bf16.msra.mxu0 0
    %146 = vmatprep.subr.bf16.mxu0 0
    %147 = vmatpush2.bf16.msra.mxu0 0
    %148 = vmatprep.mubr.bf16.mxu0 0
    %149 = vmatmul.mubr.bf16.gmra.mxu0 %v108
    %v150 = vpop.f32.mrf.mxu0
    %v151 = vadd.f32 %v46, %v150
    %v152 = vpop.f32.mrf.mxu0
    %v153 = vadd.f32 %v50, %v152
    %v154 = vpop.f32.mrf.mxu0
    %v155 = vadd.f32 %v46, %v154
    %v156 = vpop.f32.mrf.mxu0
    %v157 = vadd.f32 %v50, %v156
    %158 = vmatprep.mubr.bf16.mxu0 0
    %159 = vmatmul.mubr.bf16.gmra.mxu0 %v111
    %v160 = vpop.f32.mrf.mxu0
    %v161 = vadd.f32 %v46, %v160
    %v162 = vpop.f32.mrf.mxu0
    %v163 = vadd.f32 %v50, %v162
    %v164 = vpop.f32.mrf.mxu0
    %v165 = vadd.f32 %v46, %v164
    %v166 = vpop.f32.mrf.mxu0
    %v167 = vadd.f32 %v50, %v166
    %168 = vmatprep.mubr.bf16.mxu0 0
    %169 = vmatmul.mubr.bf16.gmra.mxu0 %v114
    %v170 = vpop.f32.mrf.mxu0
    %v171 = vadd.f32 %v46, %v170
    %v172 = vpop.f32.mrf.mxu0
    %v173 = vadd.f32 %v50, %v172
    %v174 = vpop.f32.mrf.mxu0
    %v175 = vpop.f32.mrf.mxu0
    %176 = vdwg.mxu0
    %v177 = vld [vmem:[%s2] sm:$0xf]
    %v178 = vld [vmem:[%s5] sm:$0xff]
    %v179 = vld [vmem:[%s5 + $0x8] sm:$0xff]
    %v180 = vld [vmem:[%s5 + $0x10] sm:$0xff]
    %v181 = vld [vmem:[%s5 + $0x18] sm:$0xff]
    %v182 = vld [vmem:[%s5 + $0x20] sm:$0xff]
    %v183 = vld [vmem:[%s5 + $0x28] sm:$0xff]
    %v184 = vld [vmem:[%s5 + $0x30] sm:$0xff]
    %v185 = vld [vmem:[%s5 + $0x38] sm:$0xff]
    %v186 = vld [vmem:[%s6] sm:$0x1]
    %v187 = vpack.c.bf16 %v177, %v177
    %v196 = vunpack.c.l.b16 %v178
    %v197 = vunpack.c.h.b16 %v178
    %v198 = vunpack.c.l.b16 %v179
    %v199 = vunpack.c.h.b16 %v179
    %v200 = vunpack.c.l.b16 %v180
    %v201 = vunpack.c.h.b16 %v180
    %v202 = vunpack.c.l.b16 %v181
    %v203 = vunpack.c.h.b16 %v181
    %v204 = vunpack.c.l.b16 %v182
    %v205 = vunpack.c.h.b16 %v182
    %v206 = vunpack.c.l.b16 %v183
    %v207 = vunpack.c.h.b16 %v183
    %v208 = vunpack.c.l.b16 %v184
    %v209 = vunpack.c.h.b16 %v184
    %v210 = vunpack.c.l.b16 %v185
    %v211 = vunpack.c.h.b16 %v185
    %v212 = vpack.c.b16 %v198, %v196
    %v213 = vpack.c.b16 %v199, %v197
    %v214 = vpack.c.b16 %v202, %v200
    %v215 = vpack.c.b16 %v203, %v201
    %v216 = vpack.c.b16 %v206, %v204
    %v217 = vpack.c.b16 %v207, %v205
    %v218 = vpack.c.b16 %v210, %v208
    %v219 = vpack.c.b16 %v211, %v209
    %v229 = vsel %vm106, %v187, 0
    %231 = vmatprep.subr.bf16.mxu0 0
    %232 = vmatpush1.bf16.msra.mxu0 0
    %233 = vmatprep.subr.bf16.mxu0 0
    %234 = vmatpush1.bf16.msra.mxu0 0
    %235 = vmatprep.subr.bf16.mxu0 0
    %236 = vmatpush1.bf16.msra.mxu0 0
    %237 = vmatprep.subr.bf16.mxu0 0
    %238 = vmatpush1.bf16.msra.mxu0 0
    %239 = vmatprep.subr.bf16.mxu0 %v219
    %240 = vmatpush1.bf16.msra.mxu0 %v218
    %241 = vmatprep.subr.bf16.mxu0 %v217
    %242 = vmatpush1.bf16.msra.mxu0 %v216
    %243 = vmatprep.subr.bf16.mxu0 %v215
    %244 = vmatpush1.bf16.msra.mxu0 %v214
    %245 = vmatprep.subr.bf16.mxu0 %v213
    %246 = vmatpush1.bf16.msra.mxu0 %v212
    %247 = vmatprep.subr.bf16.mxu0 0
    %248 = vmatpush2.bf16.msra.mxu0 0
    %249 = vmatprep.subr.bf16.mxu0 0
    %250 = vmatpush2.bf16.msra.mxu0 0
    %251 = vmatprep.subr.bf16.mxu0 0
    %252 = vmatpush2.bf16.msra.mxu0 0
    %253 = vmatprep.subr.bf16.mxu0 0
    %254 = vmatpush2.bf16.msra.mxu0 0
    %255 = vmatprep.subr.bf16.mxu0 0
    %256 = vmatpush2.bf16.msra.mxu0 0
    %257 = vmatprep.subr.bf16.mxu0 0
    %258 = vmatpush2.bf16.msra.mxu0 0
    %259 = vmatprep.subr.bf16.mxu0 0
    %260 = vmatpush2.bf16.msra.mxu0 0
    %261 = vmatprep.subr.bf16.mxu0 0
    %262 = vmatpush2.bf16.msra.mxu0 0
    %263 = vmatprep.mubr.bf16.mxu0 0
    %264 = vmatmul.mubr.bf16.gmra.mxu0 %v229
    %v265 = vpop.f32.mrf.mxu0
    %v266 = vadd.f32 0.0, %v265
    %v267 = vpop.f32.mrf.mxu0
    %v268 = vadd.f32 0.0, %v267
    %v269 = vpop.f32.mrf.mxu0
    %v270 = vpop.f32.mrf.mxu0
    %271 = vdwg.mxu0
    %v272 = vadd.f32 %v151, %v266
    %v273 = vxor.u32 %v272, 2147483648
    %v274 = vmul.f32 %v273, 1.442695
    %v275 = vpow.pop %v274
    %v276 = vadd.f32 %v275, 1.0
    %v277 = vrcp.pop %v276
    %v278 = vmul.f32 1.0, %v277
    %v280 = vlaneseq
    %v281 = vshrl.u32 %v280, 7
    %v282 = vsub.s32 0, %v281
    %v283 = vrot.slane %v186, %v282
    %v285 = vadd.f32 %v268, %v283
    %v286 = vmul.f32 %v278, %v285
    %v287 = vadd.f32 %v153, %v286
    %v288 = vtanh.pop %v287
    %v289 = vsub.f32 1.0, %v278
    %291 = vrot.lane.b32.xlu0 %v288, 64
    %v292 = vpop.permute.xlu0 %291
    %v294 = vmul.f32 %v289, %v292
    %296 = vrot.lane.b32.xlu0 %v177, 64
    %v297 = vpop.permute.xlu0 %296
    %v299 = vmul.f32 %v278, %v297
    %v300 = vadd.f32 %v294, %v299
    %s301 = scalar_lea.vmem %s1, 4
    %v302 = vld [vmem:[%s301] sm:$0xf]
    %vm303 = vcmp.eq.s32.totalorder %v302, 1
    %v304 = vsel %vm303, 1, 0
    %305 = vset.pattern.permute.xlu0 0
    %306 = vperm.xlu0 %305, %v304
    %v307 = vpop.permute.xlu0 %306
    %vm308 = vcmp.eq.s32.totalorder %v307, 1
    %v309 = vsel %vm308, %v300, %v297
    %v310 = vpack.c.bf16 %v309, %v309
    %312 = vrot.lane.b32.xlu0 %v310, 64
    %v313 = vpop.permute.xlu0 %312
    %v315 = vsel %vm106, %v313, 0
    %317 = vmatprep.subr.bf16.mxu0 0
    %318 = vmatpush1.bf16.msra.mxu0 0
    %319 = vmatprep.subr.bf16.mxu0 0
    %320 = vmatpush1.bf16.msra.mxu0 0
    %321 = vmatprep.subr.bf16.mxu0 0
    %322 = vmatpush1.bf16.msra.mxu0 0
    %323 = vmatprep.subr.bf16.mxu0 0
    %324 = vmatpush1.bf16.msra.mxu0 0
    %325 = vmatprep.subr.bf16.mxu0 %v219
    %326 = vmatpush1.bf16.msra.mxu0 %v218
    %327 = vmatprep.subr.bf16.mxu0 %v217
    %328 = vmatpush1.bf16.msra.mxu0 %v216
    %329 = vmatprep.subr.bf16.mxu0 %v215
    %330 = vmatpush1.bf16.msra.mxu0 %v214
    %331 = vmatprep.subr.bf16.mxu0 %v213
    %332 = vmatpush1.bf16.msra.mxu0 %v212
    %333 = vmatprep.subr.bf16.mxu0 0
    %334 = vmatpush2.bf16.msra.mxu0 0
    %335 = vmatprep.subr.bf16.mxu0 0
    %336 = vmatpush2.bf16.msra.mxu0 0
    %337 = vmatprep.subr.bf16.mxu0 0
    %338 = vmatpush2.bf16.msra.mxu0 0
    %339 = vmatprep.subr.bf16.mxu0 0
    %340 = vmatpush2.bf16.msra.mxu0 0
    %341 = vmatprep.subr.bf16.mxu0 0
    %342 = vmatpush2.bf16.msra.mxu0 0
    %343 = vmatprep.subr.bf16.mxu0 0
    %344 = vmatpush2.bf16.msra.mxu0 0
    %345 = vmatprep.subr.bf16.mxu0 0
    %346 = vmatpush2.bf16.msra.mxu0 0
    %347 = vmatprep.subr.bf16.mxu0 0
    %348 = vmatpush2.bf16.msra.mxu0 0
    %349 = vmatprep.mubr.bf16.mxu0 0
    %350 = vmatmul.mubr.bf16.gmra.mxu0 %v315
    %v351 = vpop.f32.mrf.mxu0
    %v352 = vadd.f32 0.0, %v351
    %v353 = vpop.f32.mrf.mxu0
    %v354 = vadd.f32 0.0, %v353
    %v355 = vpop.f32.mrf.mxu0
    %v356 = vpop.f32.mrf.mxu0
    %357 = vdwg.mxu0
    %v359 = vrot.slane %v352, 4
    %v361 = vadd.f32 %v151, %v359
    %v362 = vxor.u32 %v361, 2147483648
    %v363 = vmul.f32 %v362, 1.442695
    %v364 = vpow.pop %v363
    %v365 = vadd.f32 %v364, 1.0
    %v366 = vrcp.pop %v365
    %v367 = vmul.f32 1.0, %v366
    %v368 = vadd.f32 %v354, %v283
    %v370 = vrot.slane %v368, 4
    %v372 = vmul.f32 %v367, %v370
    %v373 = vadd.f32 %v153, %v372
    %v374 = vtanh.pop %v373
    %v375 = vsub.f32 1.0, %v367
    %377 = vrot.lane.b32.xlu0 %v374, 64
    %v378 = vpop.permute.xlu0 %377
    %v380 = vmul.f32 %v375, %v378
    %v382 = vrot.slane %v309, 4
    %v384 = vmul.f32 %v367, %v382
    %v385 = vadd.f32 %v380, %v384
    %s386 = scalar_lea.vmem %s1, 8
    %v387 = vld [vmem:[%s386] sm:$0xf]
    %vm388 = vcmp.eq.s32.totalorder %v387, 1
    %v389 = vsel %vm388, 1, 0
    %390 = vset.pattern.permute.xlu0 0
    %391 = vperm.xlu0 %390, %v389
    %v392 = vpop.permute.xlu0 %391
    %vm393 = vcmp.eq.s32.totalorder %v392, 1
    %v395 = vrot.slane %v385, 4
    %396 = vrot.lane.b32.xlu0 %v395, 64
    %v397 = vpop.permute.xlu0 %396
    %v399 = vsel %vm393, %v397, %v177
    %v400 = vpack.c.bf16 %v399, %v399
    %v402 = vsel %vm106, %v400, 0
    %404 = vmatprep.subr.bf16.mxu0 0
    %405 = vmatpush1.bf16.msra.mxu0 0
    %406 = vmatprep.subr.bf16.mxu0 0
    %407 = vmatpush1.bf16.msra.mxu0 0
    %408 = vmatprep.subr.bf16.mxu0 0
    %409 = vmatpush1.bf16.msra.mxu0 0
    %410 = vmatprep.subr.bf16.mxu0 0
    %411 = vmatpush1.bf16.msra.mxu0 0
    %412 = vmatprep.subr.bf16.mxu0 %v219
    %413 = vmatpush1.bf16.msra.mxu0 %v218
    %414 = vmatprep.subr.bf16.mxu0 %v217
    %415 = vmatpush1.bf16.msra.mxu0 %v216
    %416 = vmatprep.subr.bf16.mxu0 %v215
    %417 = vmatpush1.bf16.msra.mxu0 %v214
    %418 = vmatprep.subr.bf16.mxu0 %v213
    %419 = vmatpush1.bf16.msra.mxu0 %v212
    %420 = vmatprep.subr.bf16.mxu0 0
    %421 = vmatpush2.bf16.msra.mxu0 0
    %422 = vmatprep.subr.bf16.mxu0 0
    %423 = vmatpush2.bf16.msra.mxu0 0
    %424 = vmatprep.subr.bf16.mxu0 0
    %425 = vmatpush2.bf16.msra.mxu0 0
    %426 = vmatprep.subr.bf16.mxu0 0
    %427 = vmatpush2.bf16.msra.mxu0 0
    %428 = vmatprep.subr.bf16.mxu0 0
    %429 = vmatpush2.bf16.msra.mxu0 0
    %430 = vmatprep.subr.bf16.mxu0 0
    %431 = vmatpush2.bf16.msra.mxu0 0
    %432 = vmatprep.subr.bf16.mxu0 0
    %433 = vmatpush2.bf16.msra.mxu0 0
    %434 = vmatprep.subr.bf16.mxu0 0
    %435 = vmatpush2.bf16.msra.mxu0 0
    %436 = vmatprep.mubr.bf16.mxu0 0
    %437 = vmatmul.mubr.bf16.gmra.mxu0 %v402
    %v438 = vpop.f32.mrf.mxu0
    %v439 = vadd.f32 0.0, %v438
    %v440 = vpop.f32.mrf.mxu0
    %v441 = vadd.f32 0.0, %v440
    %v442 = vpop.f32.mrf.mxu0
    %v443 = vpop.f32.mrf.mxu0
    %444 = vdwg.mxu0
    %v445 = vadd.f32 %v155, %v439
    %v446 = vxor.u32 %v445, 2147483648
    %v447 = vmul.f32 %v446, 1.442695
    %v448 = vpow.pop %v447
    %v449 = vadd.f32 %v448, 1.0
    %v450 = vrcp.pop %v449
    %v451 = vmul.f32 1.0, %v450
    %v452 = vadd.f32 %v441, %v283
    %v453 = vmul.f32 %v451, %v452
    %v454 = vadd.f32 %v157, %v453
    %v455 = vtanh.pop %v454
    %v456 = vsub.f32 1.0, %v451
    %458 = vrot.lane.b32.xlu0 %v455, 64
    %v459 = vpop.permute.xlu0 %458
    %v461 = vmul.f32 %v456, %v459
    %463 = vrot.lane.b32.xlu0 %v399, 64
    %v464 = vpop.permute.xlu0 %463
    %v466 = vmul.f32 %v451, %v464
    %v467 = vadd.f32 %v461, %v466
    %s468 = scalar_lea.vmem %s1, 12
    %v469 = vld [vmem:[%s468] sm:$0xf]
    %vm470 = vcmp.eq.s32.totalorder %v469, 1
    %v471 = vsel %vm470, 1, 0
    %472 = vset.pattern.permute.xlu0 0
    %473 = vperm.xlu0 %472, %v471
    %v474 = vpop.permute.xlu0 %473
    %vm475 = vcmp.eq.s32.totalorder %v474, 1
    %v476 = vsel %vm475, %v467, %v297
    %v477 = vpack.c.bf16 %v476, %v476
    %479 = vrot.lane.b32.xlu0 %v477, 64
    %v480 = vpop.permute.xlu0 %479
    %v482 = vsel %vm106, %v480, 0
    %484 = vmatprep.subr.bf16.mxu0 0
    %485 = vmatpush1.bf16.msra.mxu0 0
    %486 = vmatprep.subr.bf16.mxu0 0
    %487 = vmatpush1.bf16.msra.mxu0 0
    %488 = vmatprep.subr.bf16.mxu0 0
    %489 = vmatpush1.bf16.msra.mxu0 0
    %490 = vmatprep.subr.bf16.mxu0 0
    %491 = vmatpush1.bf16.msra.mxu0 0
    %492 = vmatprep.subr.bf16.mxu0 %v219
    %493 = vmatpush1.bf16.msra.mxu0 %v218
    %494 = vmatprep.subr.bf16.mxu0 %v217
    %495 = vmatpush1.bf16.msra.mxu0 %v216
    %496 = vmatprep.subr.bf16.mxu0 %v215
    %497 = vmatpush1.bf16.msra.mxu0 %v214
    %498 = vmatprep.subr.bf16.mxu0 %v213
    %499 = vmatpush1.bf16.msra.mxu0 %v212
    %500 = vmatprep.subr.bf16.mxu0 0
    %501 = vmatpush2.bf16.msra.mxu0 0
    %502 = vmatprep.subr.bf16.mxu0 0
    %503 = vmatpush2.bf16.msra.mxu0 0
    %504 = vmatprep.subr.bf16.mxu0 0
    %505 = vmatpush2.bf16.msra.mxu0 0
    %506 = vmatprep.subr.bf16.mxu0 0
    %507 = vmatpush2.bf16.msra.mxu0 0
    %508 = vmatprep.subr.bf16.mxu0 0
    %509 = vmatpush2.bf16.msra.mxu0 0
    %510 = vmatprep.subr.bf16.mxu0 0
    %511 = vmatpush2.bf16.msra.mxu0 0
    %512 = vmatprep.subr.bf16.mxu0 0
    %513 = vmatpush2.bf16.msra.mxu0 0
    %514 = vmatprep.subr.bf16.mxu0 0
    %515 = vmatpush2.bf16.msra.mxu0 0
    %516 = vmatprep.mubr.bf16.mxu0 0
    %517 = vmatmul.mubr.bf16.gmra.mxu0 %v482
    %v518 = vpop.f32.mrf.mxu0
    %v519 = vadd.f32 0.0, %v518
    %v520 = vpop.f32.mrf.mxu0
    %v521 = vadd.f32 0.0, %v520
    %v522 = vpop.f32.mrf.mxu0
    %v523 = vpop.f32.mrf.mxu0
    %524 = vdwg.mxu0
    %v526 = vrot.slane %v519, 4
    %v528 = vadd.f32 %v155, %v526
    %v529 = vxor.u32 %v528, 2147483648
    %v530 = vmul.f32 %v529, 1.442695
    %v531 = vpow.pop %v530
    %v532 = vadd.f32 %v531, 1.0
    %v533 = vrcp.pop %v532
    %v534 = vmul.f32 1.0, %v533
    %v535 = vadd.f32 %v521, %v283
    %v537 = vrot.slane %v535, 4
    %v539 = vmul.f32 %v534, %v537
    %v540 = vadd.f32 %v157, %v539
    %v541 = vtanh.pop %v540
    %v542 = vsub.f32 1.0, %v534
    %544 = vrot.lane.b32.xlu0 %v541, 64
    %v545 = vpop.permute.xlu0 %544
    %v547 = vmul.f32 %v542, %v545
    %v549 = vrot.slane %v476, 4
    %v551 = vmul.f32 %v534, %v549
    %v552 = vadd.f32 %v547, %v551
    %s553 = scalar_lea.vmem %s1, 16
    %v554 = vld [vmem:[%s553] sm:$0xf]
    %vm555 = vcmp.eq.s32.totalorder %v554, 1
    %v556 = vsel %vm555, 1, 0
    %557 = vset.pattern.permute.xlu0 0
    %558 = vperm.xlu0 %557, %v556
    %v559 = vpop.permute.xlu0 %558
    %vm560 = vcmp.eq.s32.totalorder %v559, 1
    %v562 = vrot.slane %v552, 4
    %563 = vrot.lane.b32.xlu0 %v562, 64
    %v564 = vpop.permute.xlu0 %563
    %v566 = vsel %vm560, %v564, %v177
    %v567 = vpack.c.bf16 %v566, %v566
    %v569 = vsel %vm106, %v567, 0
    %571 = vmatprep.subr.bf16.mxu0 0
    %572 = vmatpush1.bf16.msra.mxu0 0
    %573 = vmatprep.subr.bf16.mxu0 0
    %574 = vmatpush1.bf16.msra.mxu0 0
    %575 = vmatprep.subr.bf16.mxu0 0
    %576 = vmatpush1.bf16.msra.mxu0 0
    %577 = vmatprep.subr.bf16.mxu0 0
    %578 = vmatpush1.bf16.msra.mxu0 0
    %579 = vmatprep.subr.bf16.mxu0 %v219
    %580 = vmatpush1.bf16.msra.mxu0 %v218
    %581 = vmatprep.subr.bf16.mxu0 %v217
    %582 = vmatpush1.bf16.msra.mxu0 %v216
    %583 = vmatprep.subr.bf16.mxu0 %v215
    %584 = vmatpush1.bf16.msra.mxu0 %v214
    %585 = vmatprep.subr.bf16.mxu0 %v213
    %586 = vmatpush1.bf16.msra.mxu0 %v212
    %587 = vmatprep.subr.bf16.mxu0 0
    %588 = vmatpush2.bf16.msra.mxu0 0
    %589 = vmatprep.subr.bf16.mxu0 0
    %590 = vmatpush2.bf16.msra.mxu0 0
    %591 = vmatprep.subr.bf16.mxu0 0
    %592 = vmatpush2.bf16.msra.mxu0 0
    %593 = vmatprep.subr.bf16.mxu0 0
    %594 = vmatpush2.bf16.msra.mxu0 0
    %595 = vmatprep.subr.bf16.mxu0 0
    %596 = vmatpush2.bf16.msra.mxu0 0
    %597 = vmatprep.subr.bf16.mxu0 0
    %598 = vmatpush2.bf16.msra.mxu0 0
    %599 = vmatprep.subr.bf16.mxu0 0
    %600 = vmatpush2.bf16.msra.mxu0 0
    %601 = vmatprep.subr.bf16.mxu0 0
    %602 = vmatpush2.bf16.msra.mxu0 0
    %603 = vmatprep.mubr.bf16.mxu0 0
    %604 = vmatmul.mubr.bf16.gmra.mxu0 %v569
    %v605 = vpop.f32.mrf.mxu0
    %v606 = vadd.f32 0.0, %v605
    %v607 = vpop.f32.mrf.mxu0
    %v608 = vadd.f32 0.0, %v607
    %v609 = vpop.f32.mrf.mxu0
    %v610 = vpop.f32.mrf.mxu0
    %611 = vdwg.mxu0
    %v612 = vadd.f32 %v161, %v606
    %v613 = vxor.u32 %v612, 2147483648
    %v614 = vmul.f32 %v613, 1.442695
    %v615 = vpow.pop %v614
    %v616 = vadd.f32 %v615, 1.0
    %v617 = vrcp.pop %v616
    %v618 = vmul.f32 1.0, %v617
    %v619 = vadd.f32 %v608, %v283
    %v620 = vmul.f32 %v618, %v619
    %v621 = vadd.f32 %v163, %v620
    %v622 = vtanh.pop %v621
    %v623 = vsub.f32 1.0, %v618
    %625 = vrot.lane.b32.xlu0 %v622, 64
    %v626 = vpop.permute.xlu0 %625
    %v628 = vmul.f32 %v623, %v626
    %630 = vrot.lane.b32.xlu0 %v566, 64
    %v631 = vpop.permute.xlu0 %630
    %v633 = vmul.f32 %v618, %v631
    %v634 = vadd.f32 %v628, %v633
    %s635 = scalar_lea.vmem %s1, 20
    %v636 = vld [vmem:[%s635] sm:$0xf]
    %vm637 = vcmp.eq.s32.totalorder %v636, 1
    %v638 = vsel %vm637, 1, 0
    %639 = vset.pattern.permute.xlu0 0
    %640 = vperm.xlu0 %639, %v638
    %v641 = vpop.permute.xlu0 %640
    %vm642 = vcmp.eq.s32.totalorder %v641, 1
    %v643 = vsel %vm642, %v634, %v297
    %v644 = vpack.c.bf16 %v643, %v643
    %646 = vrot.lane.b32.xlu0 %v644, 64
    %v647 = vpop.permute.xlu0 %646
    %v649 = vsel %vm106, %v647, 0
    %651 = vmatprep.subr.bf16.mxu0 0
    %652 = vmatpush1.bf16.msra.mxu0 0
    %653 = vmatprep.subr.bf16.mxu0 0
    %654 = vmatpush1.bf16.msra.mxu0 0
    %655 = vmatprep.subr.bf16.mxu0 0
    %656 = vmatpush1.bf16.msra.mxu0 0
    %657 = vmatprep.subr.bf16.mxu0 0
    %658 = vmatpush1.bf16.msra.mxu0 0
    %659 = vmatprep.subr.bf16.mxu0 %v219
    %660 = vmatpush1.bf16.msra.mxu0 %v218
    %661 = vmatprep.subr.bf16.mxu0 %v217
    %662 = vmatpush1.bf16.msra.mxu0 %v216
    %663 = vmatprep.subr.bf16.mxu0 %v215
    %664 = vmatpush1.bf16.msra.mxu0 %v214
    %665 = vmatprep.subr.bf16.mxu0 %v213
    %666 = vmatpush1.bf16.msra.mxu0 %v212
    %667 = vmatprep.subr.bf16.mxu0 0
    %668 = vmatpush2.bf16.msra.mxu0 0
    %669 = vmatprep.subr.bf16.mxu0 0
    %670 = vmatpush2.bf16.msra.mxu0 0
    %671 = vmatprep.subr.bf16.mxu0 0
    %672 = vmatpush2.bf16.msra.mxu0 0
    %673 = vmatprep.subr.bf16.mxu0 0
    %674 = vmatpush2.bf16.msra.mxu0 0
    %675 = vmatprep.subr.bf16.mxu0 0
    %676 = vmatpush2.bf16.msra.mxu0 0
    %677 = vmatprep.subr.bf16.mxu0 0
    %678 = vmatpush2.bf16.msra.mxu0 0
    %679 = vmatprep.subr.bf16.mxu0 0
    %680 = vmatpush2.bf16.msra.mxu0 0
    %681 = vmatprep.subr.bf16.mxu0 0
    %682 = vmatpush2.bf16.msra.mxu0 0
    %683 = vmatprep.mubr.bf16.mxu0 0
    %684 = vmatmul.mubr.bf16.gmra.mxu0 %v649
    %v685 = vpop.f32.mrf.mxu0
    %v686 = vadd.f32 0.0, %v685
    %v687 = vpop.f32.mrf.mxu0
    %v688 = vadd.f32 0.0, %v687
    %v689 = vpop.f32.mrf.mxu0
    %v690 = vpop.f32.mrf.mxu0
    %691 = vdwg.mxu0
    %v693 = vrot.slane %v686, 4
    %v695 = vadd.f32 %v161, %v693
    %v696 = vxor.u32 %v695, 2147483648
    %v697 = vmul.f32 %v696, 1.442695
    %v698 = vpow.pop %v697
    %v699 = vadd.f32 %v698, 1.0
    %v700 = vrcp.pop %v699
    %v701 = vmul.f32 1.0, %v700
    %v702 = vadd.f32 %v688, %v283
    %v704 = vrot.slane %v702, 4
    %v706 = vmul.f32 %v701, %v704
    %v707 = vadd.f32 %v163, %v706
    %v708 = vtanh.pop %v707
    %v709 = vsub.f32 1.0, %v701
    %711 = vrot.lane.b32.xlu0 %v708, 64
    %v712 = vpop.permute.xlu0 %711
    %v714 = vmul.f32 %v709, %v712
    %v716 = vrot.slane %v643, 4
    %v718 = vmul.f32 %v701, %v716
    %v719 = vadd.f32 %v714, %v718
    %s720 = scalar_lea.vmem %s1, 24
    %v721 = vld [vmem:[%s720] sm:$0xf]
    %vm722 = vcmp.eq.s32.totalorder %v721, 1
    %v723 = vsel %vm722, 1, 0
    %724 = vset.pattern.permute.xlu0 0
    %725 = vperm.xlu0 %724, %v723
    %v726 = vpop.permute.xlu0 %725
    %vm727 = vcmp.eq.s32.totalorder %v726, 1
    %v729 = vrot.slane %v719, 4
    %730 = vrot.lane.b32.xlu0 %v729, 64
    %v731 = vpop.permute.xlu0 %730
    %v733 = vsel %vm727, %v731, %v177
    %v734 = vpack.c.bf16 %v733, %v733
    %v736 = vsel %vm106, %v734, 0
    %738 = vmatprep.subr.bf16.mxu0 0
    %739 = vmatpush1.bf16.msra.mxu0 0
    %740 = vmatprep.subr.bf16.mxu0 0
    %741 = vmatpush1.bf16.msra.mxu0 0
    %742 = vmatprep.subr.bf16.mxu0 0
    %743 = vmatpush1.bf16.msra.mxu0 0
    %744 = vmatprep.subr.bf16.mxu0 0
    %745 = vmatpush1.bf16.msra.mxu0 0
    %746 = vmatprep.subr.bf16.mxu0 %v219
    %747 = vmatpush1.bf16.msra.mxu0 %v218
    %748 = vmatprep.subr.bf16.mxu0 %v217
    %749 = vmatpush1.bf16.msra.mxu0 %v216
    %750 = vmatprep.subr.bf16.mxu0 %v215
    %751 = vmatpush1.bf16.msra.mxu0 %v214
    %752 = vmatprep.subr.bf16.mxu0 %v213
    %753 = vmatpush1.bf16.msra.mxu0 %v212
    %754 = vmatprep.subr.bf16.mxu0 0
    %755 = vmatpush2.bf16.msra.mxu0 0
    %756 = vmatprep.subr.bf16.mxu0 0
    %757 = vmatpush2.bf16.msra.mxu0 0
    %758 = vmatprep.subr.bf16.mxu0 0
    %759 = vmatpush2.bf16.msra.mxu0 0
    %760 = vmatprep.subr.bf16.mxu0 0
    %761 = vmatpush2.bf16.msra.mxu0 0
    %762 = vmatprep.subr.bf16.mxu0 0
    %763 = vmatpush2.bf16.msra.mxu0 0
    %764 = vmatprep.subr.bf16.mxu0 0
    %765 = vmatpush2.bf16.msra.mxu0 0
    %766 = vmatprep.subr.bf16.mxu0 0
    %767 = vmatpush2.bf16.msra.mxu0 0
    %768 = vmatprep.subr.bf16.mxu0 0
    %769 = vmatpush2.bf16.msra.mxu0 0
    %770 = vmatprep.mubr.bf16.mxu0 0
    %771 = vmatmul.mubr.bf16.gmra.mxu0 %v736
    %v772 = vpop.f32.mrf.mxu0
    %v773 = vadd.f32 0.0, %v772
    %v774 = vpop.f32.mrf.mxu0
    %v775 = vadd.f32 0.0, %v774
    %v776 = vpop.f32.mrf.mxu0
    %v777 = vpop.f32.mrf.mxu0
    %778 = vdwg.mxu0
    %v779 = vadd.f32 %v165, %v773
    %v780 = vxor.u32 %v779, 2147483648
    %v781 = vmul.f32 %v780, 1.442695
    %v782 = vpow.pop %v781
    %v783 = vadd.f32 %v782, 1.0
    %v784 = vrcp.pop %v783
    %v785 = vmul.f32 1.0, %v784
    %v786 = vadd.f32 %v775, %v283
    %v787 = vmul.f32 %v785, %v786
    %v788 = vadd.f32 %v167, %v787
    %v789 = vtanh.pop %v788
    %v790 = vsub.f32 1.0, %v785
    %792 = vrot.lane.b32.xlu0 %v789, 64
    %v793 = vpop.permute.xlu0 %792
    %v795 = vmul.f32 %v790, %v793
    %797 = vrot.lane.b32.xlu0 %v733, 64
    %v798 = vpop.permute.xlu0 %797
    %v800 = vmul.f32 %v785, %v798
    %v801 = vadd.f32 %v795, %v800
    %s802 = scalar_lea.vmem %s1, 28
    %v803 = vld [vmem:[%s802] sm:$0xf]
    %vm804 = vcmp.eq.s32.totalorder %v803, 1
    %v805 = vsel %vm804, 1, 0
    %806 = vset.pattern.permute.xlu0 0
    %807 = vperm.xlu0 %806, %v805
    %v808 = vpop.permute.xlu0 %807
    %vm809 = vcmp.eq.s32.totalorder %v808, 1
    %v810 = vsel %vm809, %v801, %v297
    %v811 = vpack.c.bf16 %v810, %v810
    %813 = vrot.lane.b32.xlu0 %v811, 64
    %v814 = vpop.permute.xlu0 %813
    %v816 = vsel %vm106, %v814, 0
    %818 = vmatprep.subr.bf16.mxu0 0
    %819 = vmatpush1.bf16.msra.mxu0 0
    %820 = vmatprep.subr.bf16.mxu0 0
    %821 = vmatpush1.bf16.msra.mxu0 0
    %822 = vmatprep.subr.bf16.mxu0 0
    %823 = vmatpush1.bf16.msra.mxu0 0
    %824 = vmatprep.subr.bf16.mxu0 0
    %825 = vmatpush1.bf16.msra.mxu0 0
    %826 = vmatprep.subr.bf16.mxu0 %v219
    %827 = vmatpush1.bf16.msra.mxu0 %v218
    %828 = vmatprep.subr.bf16.mxu0 %v217
    %829 = vmatpush1.bf16.msra.mxu0 %v216
    %830 = vmatprep.subr.bf16.mxu0 %v215
    %831 = vmatpush1.bf16.msra.mxu0 %v214
    %832 = vmatprep.subr.bf16.mxu0 %v213
    %833 = vmatpush1.bf16.msra.mxu0 %v212
    %834 = vmatprep.subr.bf16.mxu0 0
    %835 = vmatpush2.bf16.msra.mxu0 0
    %836 = vmatprep.subr.bf16.mxu0 0
    %837 = vmatpush2.bf16.msra.mxu0 0
    %838 = vmatprep.subr.bf16.mxu0 0
    %839 = vmatpush2.bf16.msra.mxu0 0
    %840 = vmatprep.subr.bf16.mxu0 0
    %841 = vmatpush2.bf16.msra.mxu0 0
    %842 = vmatprep.subr.bf16.mxu0 0
    %843 = vmatpush2.bf16.msra.mxu0 0
    %844 = vmatprep.subr.bf16.mxu0 0
    %845 = vmatpush2.bf16.msra.mxu0 0
    %846 = vmatprep.subr.bf16.mxu0 0
    %847 = vmatpush2.bf16.msra.mxu0 0
    %848 = vmatprep.subr.bf16.mxu0 0
    %849 = vmatpush2.bf16.msra.mxu0 0
    %850 = vmatprep.mubr.bf16.mxu0 0
    %851 = vmatmul.mubr.bf16.gmra.mxu0 %v816
    %v852 = vpop.f32.mrf.mxu0
    %v853 = vadd.f32 0.0, %v852
    %v854 = vpop.f32.mrf.mxu0
    %v855 = vadd.f32 0.0, %v854
    %v856 = vpop.f32.mrf.mxu0
    %v857 = vpop.f32.mrf.mxu0
    %858 = vdwg.mxu0
    %v860 = vrot.slane %v853, 4
    %v862 = vadd.f32 %v165, %v860
    %v863 = vxor.u32 %v862, 2147483648
    %v864 = vmul.f32 %v863, 1.442695
    %v865 = vpow.pop %v864
    %v866 = vadd.f32 %v865, 1.0
    %v867 = vrcp.pop %v866
    %v868 = vmul.f32 1.0, %v867
    %v869 = vadd.f32 %v855, %v283
    %v871 = vrot.slane %v869, 4
    %v873 = vmul.f32 %v868, %v871
    %v874 = vadd.f32 %v167, %v873
    %v875 = vtanh.pop %v874
    %v876 = vsub.f32 1.0, %v868
    %878 = vrot.lane.b32.xlu0 %v875, 64
    %v879 = vpop.permute.xlu0 %878
    %v881 = vmul.f32 %v876, %v879
    %v883 = vrot.slane %v810, 4
    %v885 = vmul.f32 %v868, %v883
    %v886 = vadd.f32 %v881, %v885
    %s887 = scalar_lea.vmem %s1, 32
    %v888 = vld [vmem:[%s887] sm:$0xf]
    %vm889 = vcmp.eq.s32.totalorder %v888, 1
    %v890 = vsel %vm889, 1, 0
    %891 = vset.pattern.permute.xlu0 0
    %892 = vperm.xlu0 %891, %v890
    %v893 = vpop.permute.xlu0 %892
    %vm894 = vcmp.eq.s32.totalorder %v893, 1
    %v896 = vrot.slane %v886, 4
    %897 = vrot.lane.b32.xlu0 %v896, 64
    %v898 = vpop.permute.xlu0 %897
    %v900 = vsel %vm894, %v898, %v177
    %v901 = vpack.c.bf16 %v900, %v900
    %v903 = vsel %vm106, %v901, 0
    %905 = vmatprep.subr.bf16.mxu0 0
    %906 = vmatpush1.bf16.msra.mxu0 0
    %907 = vmatprep.subr.bf16.mxu0 0
    %908 = vmatpush1.bf16.msra.mxu0 0
    %909 = vmatprep.subr.bf16.mxu0 0
    %910 = vmatpush1.bf16.msra.mxu0 0
    %911 = vmatprep.subr.bf16.mxu0 0
    %912 = vmatpush1.bf16.msra.mxu0 0
    %913 = vmatprep.subr.bf16.mxu0 %v219
    %914 = vmatpush1.bf16.msra.mxu0 %v218
    %915 = vmatprep.subr.bf16.mxu0 %v217
    %916 = vmatpush1.bf16.msra.mxu0 %v216
    %917 = vmatprep.subr.bf16.mxu0 %v215
    %918 = vmatpush1.bf16.msra.mxu0 %v214
    %919 = vmatprep.subr.bf16.mxu0 %v213
    %920 = vmatpush1.bf16.msra.mxu0 %v212
    %921 = vmatprep.subr.bf16.mxu0 0
    %922 = vmatpush2.bf16.msra.mxu0 0
    %923 = vmatprep.subr.bf16.mxu0 0
    %924 = vmatpush2.bf16.msra.mxu0 0
    %925 = vmatprep.subr.bf16.mxu0 0
    %926 = vmatpush2.bf16.msra.mxu0 0
    %927 = vmatprep.subr.bf16.mxu0 0
    %928 = vmatpush2.bf16.msra.mxu0 0
    %929 = vmatprep.subr.bf16.mxu0 0
    %930 = vmatpush2.bf16.msra.mxu0 0
    %931 = vmatprep.subr.bf16.mxu0 0
    %932 = vmatpush2.bf16.msra.mxu0 0
    %933 = vmatprep.subr.bf16.mxu0 0
    %934 = vmatpush2.bf16.msra.mxu0 0
    %935 = vmatprep.subr.bf16.mxu0 0
    %936 = vmatpush2.bf16.msra.mxu0 0
    %937 = vmatprep.mubr.bf16.mxu0 0
    %938 = vmatmul.mubr.bf16.gmra.mxu0 %v903
    %v939 = vpop.f32.mrf.mxu0
    %v940 = vadd.f32 0.0, %v939
    %v941 = vpop.f32.mrf.mxu0
    %v942 = vadd.f32 0.0, %v941
    %v943 = vpop.f32.mrf.mxu0
    %v944 = vpop.f32.mrf.mxu0
    %945 = vdwg.mxu0
    %v946 = vadd.f32 %v171, %v940
    %v947 = vxor.u32 %v946, 2147483648
    %v948 = vmul.f32 %v947, 1.442695
    %v949 = vpow.pop %v948
    %v950 = vadd.f32 %v949, 1.0
    %v951 = vrcp.pop %v950
    %v952 = vmul.f32 1.0, %v951
    %v953 = vadd.f32 %v942, %v283
    %v954 = vmul.f32 %v952, %v953
    %v955 = vadd.f32 %v173, %v954
    %v956 = vtanh.pop %v955
    %v957 = vsub.f32 1.0, %v952
    %959 = vrot.lane.b32.xlu0 %v956, 64
    %v960 = vpop.permute.xlu0 %959
    %v962 = vmul.f32 %v957, %v960
    %964 = vrot.lane.b32.xlu0 %v900, 64
    %v965 = vpop.permute.xlu0 %964
    %v967 = vmul.f32 %v952, %v965
    %v968 = vadd.f32 %v962, %v967
    %s969 = scalar_lea.vmem %s1, 36
    %v970 = vld [vmem:[%s969] sm:$0xf]
    %vm971 = vcmp.eq.s32.totalorder %v970, 1
    %v972 = vsel %vm971, 1, 0
    %973 = vset.pattern.permute.xlu0 0
    %974 = vperm.xlu0 %973, %v972
    %v975 = vpop.permute.xlu0 %974
    %vm976 = vcmp.eq.s32.totalorder %v975, 1
    %v977 = vsel %vm976, %v968, %v297
    %v978 = vpack.c.bf16 %v977, %v977
    %980 = vrot.lane.b32.xlu0 %v978, 64
    %v981 = vpop.permute.xlu0 %980
    %v983 = vsel %vm106, %v981, 0
    %985 = vmatprep.subr.bf16.mxu0 0
    %986 = vmatpush1.bf16.msra.mxu0 0
    %987 = vmatprep.subr.bf16.mxu0 0
    %988 = vmatpush1.bf16.msra.mxu0 0
    %989 = vmatprep.subr.bf16.mxu0 0
    %990 = vmatpush1.bf16.msra.mxu0 0
    %991 = vmatprep.subr.bf16.mxu0 0
    %992 = vmatpush1.bf16.msra.mxu0 0
    %993 = vmatprep.subr.bf16.mxu0 %v219
    %994 = vmatpush1.bf16.msra.mxu0 %v218
    %995 = vmatprep.subr.bf16.mxu0 %v217
    %996 = vmatpush1.bf16.msra.mxu0 %v216
    %997 = vmatprep.subr.bf16.mxu0 %v215
    %998 = vmatpush1.bf16.msra.mxu0 %v214
    %999 = vmatprep.subr.bf16.mxu0 %v213
    %1000 = vmatpush1.bf16.msra.mxu0 %v212
    %1001 = vmatprep.subr.bf16.mxu0 0
    %1002 = vmatpush2.bf16.msra.mxu0 0
    %1003 = vmatprep.subr.bf16.mxu0 0
    %1004 = vmatpush2.bf16.msra.mxu0 0
    %1005 = vmatprep.subr.bf16.mxu0 0
    %1006 = vmatpush2.bf16.msra.mxu0 0
    %1007 = vmatprep.subr.bf16.mxu0 0
    %1008 = vmatpush2.bf16.msra.mxu0 0
    %1009 = vmatprep.subr.bf16.mxu0 0
    %1010 = vmatpush2.bf16.msra.mxu0 0
    %1011 = vmatprep.subr.bf16.mxu0 0
    %1012 = vmatpush2.bf16.msra.mxu0 0
    %1013 = vmatprep.subr.bf16.mxu0 0
    %1014 = vmatpush2.bf16.msra.mxu0 0
    %1015 = vmatprep.subr.bf16.mxu0 0
    %1016 = vmatpush2.bf16.msra.mxu0 0
    %1017 = vmatprep.mubr.bf16.mxu0 0
    %1018 = vmatmul.mubr.bf16.gmra.mxu0 %v983
    %v1019 = vpop.f32.mrf.mxu0
    %v1020 = vadd.f32 0.0, %v1019
    %v1021 = vpop.f32.mrf.mxu0
    %v1022 = vadd.f32 0.0, %v1021
    %v1023 = vpop.f32.mrf.mxu0
    %v1024 = vpop.f32.mrf.mxu0
    %1025 = vdwg.mxu0
    %v1027 = vrot.slane %v1020, 4
    %v1029 = vadd.f32 %v171, %v1027
    %v1030 = vxor.u32 %v1029, 2147483648
    %v1031 = vmul.f32 %v1030, 1.442695
    %v1032 = vpow.pop %v1031
    %v1033 = vadd.f32 %v1032, 1.0
    %v1034 = vrcp.pop %v1033
    %v1035 = vmul.f32 1.0, %v1034
    %v1036 = vadd.f32 %v1022, %v283
    %v1038 = vrot.slane %v1036, 4
    %v1040 = vmul.f32 %v1035, %v1038
    %v1041 = vadd.f32 %v173, %v1040
    %v1042 = vtanh.pop %v1041
    %v1043 = vsub.f32 1.0, %v1035
    %1045 = vrot.lane.b32.xlu0 %v1042, 64
    %v1046 = vpop.permute.xlu0 %1045
    %v1048 = vmul.f32 %v1043, %v1046
    %v1050 = vrot.slane %v977, 4
    %v1052 = vmul.f32 %v1035, %v1050
    %v1053 = vadd.f32 %v1048, %v1052
    %1055 = vrot.lane.b32.xlu0 %v300, 64
    %v1056 = vpop.permute.xlu0 %1055
    %v1059 = vrot.slane %v1053, 6
    %v1061 = vsel %vm106, %v1056, %v1059
    %1062 = vst [vmem:[#allocation2] sm:$0x3] %v1061
    %1063 = vrot.lane.b32.xlu0 %v385, 64
    %v1064 = vpop.permute.xlu0 %1063
    %v1067 = vrot.slane %v968, 6
    %v1069 = vsel %vm106, %v1064, %v1067
    %s1070 = scalar_lea.vmem [#allocation2], 2
    %1071 = vst [vmem:[%s1070 - $0x4] sm:$0x30] %v1069
    %1073 = vrot.lane.b32.xlu0 %v467, 64
    %v1074 = vpop.permute.xlu0 %1073
    %v1076 = vrot.slane %v886, 6
    %v1078 = vsel %vm106, %v1074, %v1076
    %s1079 = scalar_lea.vmem [#allocation2], 4
    %1080 = vst [vmem:[%s1079] sm:$0x3] %v1078
    %1081 = vrot.lane.b32.xlu0 %v552, 64
    %v1082 = vpop.permute.xlu0 %1081
    %v1085 = vrot.slane %v801, 6
    %v1087 = vsel %vm106, %v1082, %v1085
    %s1088 = scalar_lea.vmem [#allocation2], 6
    %1089 = vst [vmem:[%s1088 - $0x4] sm:$0x30] %v1087
    %1091 = vrot.lane.b32.xlu0 %v634, 64
    %v1092 = vpop.permute.xlu0 %1091
    %v1094 = vrot.slane %v719, 6
    %v1096 = vsel %vm106, %v1092, %v1094
    %s1097 = scalar_lea.vmem [#allocation2], 8
    %1098 = vst [vmem:[%s1097] sm:$0x3] %v1096
    %1099 = vrot.lane.b32.xlu0 %v719, 64
    %v1100 = vpop.permute.xlu0 %1099
    %v1102 = vrot.slane %v634, 6
    %v1104 = vsel %vm106, %v1100, %v1102
    %s1105 = scalar_lea.vmem [#allocation2], 10
    %1106 = vst [vmem:[%s1105 - $0x4] sm:$0x30] %v1104
    %1107 = vrot.lane.b32.xlu0 %v801, 64
    %v1108 = vpop.permute.xlu0 %1107
    %v1110 = vrot.slane %v552, 6
    %v1112 = vsel %vm106, %v1108, %v1110
    %s1113 = scalar_lea.vmem [#allocation2], 12
    %1114 = vst [vmem:[%s1113] sm:$0x3] %v1112
    %1115 = vrot.lane.b32.xlu0 %v886, 64
    %v1116 = vpop.permute.xlu0 %1115
    %v1118 = vrot.slane %v467, 6
    %v1120 = vsel %vm106, %v1116, %v1118
    %s1121 = scalar_lea.vmem [#allocation2], 14
    %1122 = vst [vmem:[%s1121 - $0x4] sm:$0x30] %v1120
    %1123 = vrot.lane.b32.xlu0 %v968, 64
    %v1124 = vpop.permute.xlu0 %1123
    %v1126 = vrot.slane %v385, 6
    %v1128 = vsel %vm106, %v1124, %v1126
    %s1129 = scalar_lea.vmem [#allocation2], 16
    %1130 = vst [vmem:[%s1129] sm:$0x3] %v1128
    %1131 = vrot.lane.b32.xlu0 %v1053, 64
    %v1132 = vpop.permute.xlu0 %1131
    %v1134 = vrot.slane %v300, 6
    %v1136 = vsel %vm106, %v1132, %v1134
    %s1137 = scalar_lea.vmem [#allocation2], 18
    %1138 = vst [vmem:[%s1137 - $0x4] sm:$0x30] %v1136
    // Predicated region
    $region30: #{persona_gru_forward.1} parent=1 // pred_check
      _
    $region31: #{persona_gru_forward.1} parent=1 // pred_check_branch
      %1140 = sbr.rel (0) target = $region33
    $region32: #{persona_gru_forward.1} parent=1 // pred_region
      %s1142 = ssub.s32 320, 320
      %1143 = vsyncadd [#allocation3], %s1142
      %s1144 = sshll.u32 [#allocation2], 4
      %s1145 = int_to_ptr.vmem [resolvable:$true] %s1144
      %1150 = dma.vmem_to_hbm [thread:$0]  %s1145, 320, %s7, [#allocation3], 32, 32, 2
    $region33: #{persona_gru_forward.1} parent=1 // pred_fallthru
      _
    // Predicated region
    $region34: #{persona_gru_forward.1} parent=1 // pred_check
      _
    $region35: #{persona_gru_forward.1} parent=1 // pred_check_branch
      %1152 = sbr.rel (0) target = $region37
    $region36: #{persona_gru_forward.1} parent=1 // pred_region
      %1153 = dma.done [#allocation3], 320
    $region37: #{persona_gru_forward.1} parent=1 // pred_fallthru
      _
    %1154 = vsyncpa [#allocation3], 1

</llo_original>
